<compile_context>
chip_gen: v7x
topology: tpu7x:2x2x1
jax: 0.10.0
libtpu: 0.0.40
codegen_flags: <defaults>
</compile_context>

<pallas_src>
import functools

import jax
import jax.numpy as jnp
import numpy as np
from jax.experimental import pallas as pl
from jax.experimental.pallas import tpu as pltpu


def _inverted_residual_kernel(*refs, expand, identity, stride, width, tile_rows):
    W = width
    To = tile_rows                   # output rows produced by this grid step
    TIN = To * stride                # input rows covered (without halo)
    # Padded rows seen by the 3x3 depthwise conv.  stride-2 never reads a
    # bottom halo row (max tap row is TIN-1), so none is passed / DMA'd.
    P = TIN + 2 if stride == 1 else TIN + 1
    Wo = W // stride
    n_acc = To * W                   # depthwise rows computed (all columns)
    n_out = To * Wo                  # rows actually written (after col decimation)

    refs = list(refs)
    dw_ref = refs.pop() if stride == 2 else None     # scratch (stride-2 only)
    out_ref = refs.pop()
    it = iter(refs)
    x_ref = next(it)
    top_ref = next(it)
    bot_ref = next(it) if stride == 1 else None
    if expand:
        w1_ref, s1_ref, b1_ref = next(it), next(it), next(it)
    wd_ref, b2_ref = next(it), next(it)              # wd has BN scale pre-folded
    w3_ref, s3_ref, b3_ref = next(it), next(it), next(it)

    Cin = x_ref.shape[-1]

    # ---- assemble the halo'd input tile, flat (P*W, Cin), bf16 ----
    x_center = x_ref[0]                              # (TIN*W, Cin)
    pieces = [top_ref[...].reshape(W, Cin), x_center]
    if stride == 1:
        pieces.append(bot_ref[...].reshape(W, Cin))
    xp = jnp.concatenate(pieces, axis=0)             # (P*W, Cin)

    # ---- 1x1 expand conv (MXU, bf16 x bf16 -> f32 acc) + BN + ReLU6 ----
    if expand:
        h = jnp.dot(xp, w1_ref[...], preferred_element_type=jnp.float32)
        h = h * s1_ref[...] + b1_ref[...]
        h = jnp.clip(h, 0.0, 6.0)
        # The depthwise conv zero-pads *h*, not x: at the image top (and bottom
        # for stride 1) the halo rows must be exactly 0 (a zero x row would
        # otherwise give clip(b1, 0, 6)).
        i = pl.program_id(1)
        rows = jax.lax.broadcasted_iota(jnp.int32, (P * W, 1), 0)
        pad_rows = (rows < W) & (i == 0)
        if stride == 1:
            pad_rows |= (rows >= (P - 1) * W) & (i == pl.num_programs(1) - 1)
        h = jnp.where(pad_rows, 0.0, h)
    else:
        h = xp.astype(jnp.float32)   # wrapper halos are already zero at borders
    Chid = h.shape[-1]

    # ---- 3x3 depthwise conv (BN scale folded into wd) + bias + ReLU6 ----
    # Column taps via sublane rolls (XLU slot -> no relayout copies); the
    # left/right boundary masks are applied once here, hoisted out of the
    # 9-tap MAC.  Roll wraparound only lands on rows the masks zero anyway.
    npad = P * W
    col = jax.lax.broadcasted_iota(jnp.int32, (npad, 1), 0) % W
    left = jnp.where(col > 0, pltpu.roll(h, shift=1, axis=0), 0.0)
    right = jnp.where(col < W - 1, pltpu.roll(h, shift=npad - 1, axis=0), 0.0)
    col_taps = (left, h, right)
    wd = wd_ref[...]                                 # (9, Chid), s2 pre-folded

    acc = jnp.zeros((n_acc, Chid), jnp.float32)
    if stride == 1:
        for dj in range(3):
            src = col_taps[dj]
            for di in range(3):
                tap = src[di * W:di * W + n_acc]     # aligned row-slab slice
                k = di * 3 + dj
                acc = acc + tap * wd[k:k + 1]
    else:
        # stride 2: only even output rows are accumulated.  Row selection uses
        # two hoisted (To, 2, W, Chid) views per column tap (aligned leading
        # slices + free reshapes) indexed by tap-row parity, instead of a
        # reshape/slice/reshape round trip per tap.
        for dj in range(3):
            src = col_taps[dj]
            v0 = src[0:2 * To * W].reshape(To, 2, W, Chid)        # rows 0..2To-1
            v1 = src[W:(2 * To + 1) * W].reshape(To, 2, W, Chid)  # rows 1..2To
            row_sel = (v0[:, 0], v0[:, 1], v1[:, 1])              # di = 0, 1, 2
            for di in range(3):
                tap = row_sel[di].reshape(n_acc, Chid)
                k = di * 3 + dj
                acc = acc + tap * wd[k:k + 1]

    if stride == 2:
        # Decimate to even output columns BEFORE the bias + ReLU6 epilogue
        # (halves the epilogue VALU work and the projection matmul M).
        dw_ref[...] = acc
        acc = dw_ref[pl.ds(0, n_out, stride=2), :]
    acc = jnp.clip(acc + b2_ref[...], 0.0, 6.0)

    # ---- 1x1 projection conv (MXU) + BN (linear bottleneck, no ReLU) ----
    y = jnp.dot(acc.astype(jnp.bfloat16), w3_ref[...],
                preferred_element_type=jnp.float32)
    y = y * s3_ref[...] + b3_ref[...]

    # ---- residual add (intentional quantization point: bf16 skip input) ----
    if identity:
        y = y + x_center.astype(jnp.float32)

    out_ref[0] = y.astype(out_ref.dtype)


def _vmem_capacity_bytes():
    try:
        info = pltpu.get_tpu_info()
        cap = getattr(info, "vmem_capacity_bytes", None)
        if cap:
            return int(cap)
    except Exception:
        pass
    return 128 << 20        # v5e / v6e default


def _step_footprint_bytes(tile_rows, stride, w, cin, chid, cout):
    """Rough per-grid-step VMEM footprint (double-buffered I/O + f32 temps)."""
    tin = tile_rows * stride
    p = tin + (2 if stride == 1 else 1)
    w_out = w // stride
    f = 2 * (tin * w * cin * 2)                    # x block (bf16), x2 buffers
    f += 2 * (2 * w * cin * 2)                     # halo rows, x2 buffers
    f += 2 * (tile_rows * w_out * cout * 4)        # output block (f32), x2 buffers
    f += 6 * (p * w * chid * 4)                    # live f32 hidden-tile temps
    if stride == 2:
        f += tile_rows * w * chid * 4              # depthwise scratch
    f += 2 * 4 * (cin * chid + 10 * chid + chid * cout + 2 * cout)   # weights
    return f


def _pick_tile_rows(h_out, stride, w, cin, chid, cout, batch):
    """Largest row tile whose per-step footprint fits ~40% of physical VMEM.

    Generation-aware (64 MiB on v7x vs 128 MiB on v5e/v6e); keeps blocks
    (8,128)-friendly when tiling and prefers >= 2 total grid steps so both of
    v7x's TensorCores get work."""
    budget = int(0.4 * _vmem_capacity_bytes())
    w_out = w // stride
    cands = []
    for t in range(1, h_out + 1):
        if h_out % t:
            continue
        if h_out // t > 1 and ((t * stride * w) % 8 or (t * w_out) % 8):
            continue
        cands.append(t)
    fitting = [t for t in cands
               if _step_footprint_bytes(t, stride, w, cin, chid, cout) <= budget]
    pool = fitting if fitting else [min(cands)]
    multi = [t for t in pool if batch * (h_out // t) >= 2]
    return max(multi) if multi else max(pool)


def inverted_residual_nhwc(x_nhwc, params, *, stride, expand_ratio, tile_rows=None):
    """InvertedResidual forward pass on an NHWC activation (inference BN).

    For a chain of blocks call this entry point directly so the NCHW<->NHWC
    transposes happen once at the network boundary instead of per block."""
    assert stride in (1, 2)
    B, H, W, Cin = x_nhwc.shape
    Chid = params["wd"].shape[1]
    Cout = params["w3"].shape[1]
    expand = expand_ratio != 1
    identity = (stride == 1) and (Cin == Cout)

    assert H % stride == 0 and W % stride == 0
    H_out, W_out = H // stride, W // stride

    To = (tile_rows if tile_rows is not None
          else _pick_tile_rows(H_out, stride, W, Cin, Chid, Cout, B))
    assert H_out % To == 0
    TIN = To * stride
    n_tiles = H_out // To
    if n_tiles > 1:
        assert (TIN * W) % 8 == 0 and (To * W_out) % 8 == 0

    # bf16 activations: halves HBM traffic and feeds the MXU directly.
    x_nhwc = x_nhwc.astype(jnp.bfloat16)
    x_flat = x_nhwc.reshape(B, H * W, Cin)

    # Halo rows for the 3x3 depthwise conv (zeros at the image border).
    # The stride-2 path never reads a bottom halo row, so it is not built.
    zrow = jnp.zeros((B, 1, W, Cin), x_nhwc.dtype)
    if n_tiles > 1:
        top = jnp.concatenate([zrow, x_nhwc[:, TIN - 1:H - 1:TIN]], axis=1)
    else:
        top = zrow
    if stride == 1:
        if n_tiles > 1:
            bot = jnp.concatenate([x_nhwc[:, TIN::TIN], zrow], axis=1)
        else:
            bot = zrow

    kernel = functools.partial(_inverted_residual_kernel, expand=expand,
                               identity=identity, stride=stride, width=W,
                               tile_rows=To)

    def _const(shape):
        return pl.BlockSpec(shape, lambda b, i: (0,) * len(shape))

    in_specs = [
        pl.BlockSpec((1, TIN * W, Cin), lambda b, i: (b, i, 0)),    # x row block
        pl.BlockSpec((1, 1, W, Cin), lambda b, i: (b, i, 0, 0)),    # top halo row
    ]
    args = [x_flat, top]
    if stride == 1:
        in_specs.append(pl.BlockSpec((1, 1, W, Cin), lambda b, i: (b, i, 0, 0)))
        args.append(bot)                                            # bottom halo
    if expand:
        in_specs += [_const((Cin, Chid)), _const((1, Chid)), _const((1, Chid))]
        args += [params["w1"].astype(jnp.bfloat16), params["s1"], params["b1"]]
    # Depthwise BN scale folded into the weights (saves a full-tile VALU mul).
    wd_folded = (params["wd"] * params["s2"]).astype(jnp.float32)
    in_specs += [_const((9, Chid)), _const((1, Chid)),
                 _const((Chid, Cout)), _const((1, Cout)), _const((1, Cout))]
    args += [wd_folded, params["b2"],
             params["w3"].astype(jnp.bfloat16), params["s3"], params["b3"]]

    scratch_shapes = []
    if stride == 2:
        scratch_shapes.append(pltpu.VMEM((To * W, Chid), jnp.float32))

    vmem_limit = int(min(0.6 * _vmem_capacity_bytes(),
                         max(32 << 20,
                             2 * _step_footprint_bytes(To, stride, W, Cin,
                                                       Chid, Cout))))

    out_flat = pl.pallas_call(
        kernel,
        out_shape=jax.ShapeDtypeStruct((B, H_out * W_out, Cout), jnp.float32),
        grid_spec=pltpu.PrefetchScalarGridSpec(
            num_scalar_prefetch=0,
            grid=(B, n_tiles),
            in_specs=in_specs,
            out_specs=pl.BlockSpec((1, To * W_out, Cout), lambda b, i: (b, i, 0)),
            scratch_shapes=scratch_shapes,
        ),
        compiler_params=pltpu.CompilerParams(
            dimension_semantics=("parallel", "parallel"),
            vmem_limit_bytes=vmem_limit,
        ),
    )(*args)

    return out_flat.reshape(B, H_out, W_out, Cout)


def inverted_residual(x_nchw, params, *, stride, expand_ratio, tile_rows=None):
    """NCHW wrapper matching the PyTorch module's layout (used by the test)."""
    x_nhwc = jnp.transpose(x_nchw, (0, 2, 3, 1))
    out = inverted_residual_nhwc(x_nhwc, params, stride=stride,
                                 expand_ratio=expand_ratio, tile_rows=tile_rows)
    return jnp.transpose(out, (0, 3, 1, 2))


def init_params(key, inp, oup, expand_ratio, eps=1e-5):
    hidden = int(round(inp * expand_ratio))
    ks = list(jax.random.split(key, 8))

    def bn_fold(k, c):
        kg, kb, km, kv = jax.random.split(k, 4)
        gamma = jax.random.uniform(kg, (c,), minval=0.5, maxval=1.5)
        beta = 0.1 * jax.random.normal(kb, (c,))
        mean = 0.1 * jax.random.normal(km, (c,))
        var = jax.random.uniform(kv, (c,), minval=0.5, maxval=1.5)
        scale = gamma / jnp.sqrt(var + eps)
        bias = beta - mean * scale
        return (scale.reshape(1, c).astype(jnp.float32),
                bias.reshape(1, c).astype(jnp.float32))

    if expand_ratio != 1:
        w1 = (jax.random.normal(ks[0], (inp, hidden)) *
              (2.0 / inp) ** 0.5).astype(jnp.float32)
        s1, b1 = bn_fold(ks[1], hidden)
    else:
        w1 = s1 = b1 = None           # no expand conv: nothing is passed/DMA'd

    # depthwise 3x3 weights stored as (9, hidden): row = 3*ki + kj
    wd = (jax.random.normal(ks[2], (9, hidden)) * (2.0 / 9.0) ** 0.5
          ).astype(jnp.float32)
    s2, b2 = bn_fold(ks[3], hidden)

    w3 = (jax.random.normal(ks[4], (hidden, oup)) *
          (2.0 / hidden) ** 0.5).astype(jnp.float32)
    s3, b3 = bn_fold(ks[5], oup)

    return dict(w1=w1, s1=s1, b1=b1, wd=wd, s2=s2, b2=b2,
                w3=w3, s3=s3, b3=b3)


def ref_forward(x_nchw, p, *, stride, expand_ratio):
    """Independent pure-JAX reference (lax convs), mirroring the kernel's bf16
    quantization points for the two 1x1 convs (f32 accumulation)."""
    B, Cin, H, W = x_nchw.shape
    Chid = p["wd"].shape[1]
    Cout = p["w3"].shape[1]
    identity = (stride == 1) and (Cin == Cout)
    dn = ("NHWC", "HWIO", "NHWC")
    x = jnp.transpose(x_nchw, (0, 2, 3, 1))
    xq = x.astype(jnp.bfloat16)
    if expand_ratio != 1:
        h = jax.lax.conv_general_dilated(
            xq, p["w1"].astype(jnp.bfloat16).reshape(1, 1, Cin, Chid),
            (1, 1), "VALID", dimension_numbers=dn,
            preferred_element_type=jnp.float32)
        h = jnp.clip(h * p["s1"][0] + p["b1"][0], 0.0, 6.0)
    else:
        h = xq.astype(jnp.float32)
    wd = p["wd"].reshape(3, 3, 1, Chid)
    h = jax.lax.conv_general_dilated(
        h, wd, (stride, stride), ((1, 1), (1, 1)), dimension_numbers=dn,
        feature_group_count=Chid, precision=jax.lax.Precision.HIGHEST,
        preferred_element_type=jnp.float32)
    h = jnp.clip(h * p["s2"][0] + p["b2"][0], 0.0, 6.0)
    y = jax.lax.conv_general_dilated(
        h.astype(jnp.bfloat16),
        p["w3"].astype(jnp.bfloat16).reshape(1, 1, Chid, Cout),
        (1, 1), "VALID", dimension_numbers=dn,
        preferred_element_type=jnp.float32)
    y = y * p["s3"][0] + p["b3"][0]
    if identity:
        y = y + xq.astype(jnp.float32)
    return jnp.transpose(y, (0, 3, 1, 2))


if __name__ == "__main__":
    key = jax.random.PRNGKey(0)
    configs = [
        # (inp, oup,  H,  W, stride, expand_ratio, tile_rows)
        (8,  8, 16, 16, 1, 6, 8),     # expand + identity (residual add), 2 row tiles
        (8, 16, 16, 16, 2, 6, 4),     # expand + in-kernel stride-2, 2 row tiles
        (8,  8, 16, 16, 1, 1, None),  # expand_ratio == 1 + identity, auto tile
        (8, 16, 16, 16, 2, 1, None),  # expand_ratio == 1 + stride-2, auto tile
    ]
    for inp, oup, H, W, stride, er, tr in configs:
        key, kx, kp = jax.random.split(key, 3)
        x = jax.random.normal(kx, (2, inp, H, W), dtype=jnp.float32)  # NCHW
        params = init_params(kp, inp, oup, er)

        out = jax.block_until_ready(
            inverted_residual(x, params, stride=stride, expand_ratio=er,
                              tile_rows=tr))
        ref = jax.block_until_ready(
            ref_forward(x, params, stride=stride, expand_ratio=er))

        assert out.shape == (2, oup, H // stride, W // stride), out.shape
        np.testing.assert_allclose(np.asarray(out), np.asarray(ref),
                                   rtol=5e-3, atol=5e-3)
    print("KERNEL_OK")
</pallas_src>

<mosaic_0001>
module attributes {stable_mosaic.version = 11 : i64} {
  func.func @_inverted_residual_kernel(%arg0: i32, %arg1: i32, %arg2: memref<1x128x8xbf16, #tpu.memory_space<vmem>>, %arg3: memref<1x1x16x8xbf16, #tpu.memory_space<vmem>>, %arg4: memref<1x1x16x8xbf16, #tpu.memory_space<vmem>>, %arg5: memref<8x48xbf16, #tpu.memory_space<vmem>>, %arg6: memref<1x48xf32, #tpu.memory_space<vmem>>, %arg7: memref<1x48xf32, #tpu.memory_space<vmem>>, %arg8: memref<9x48xf32, #tpu.memory_space<vmem>>, %arg9: memref<1x48xf32, #tpu.memory_space<vmem>>, %arg10: memref<48x8xbf16, #tpu.memory_space<vmem>>, %arg11: memref<1x8xf32, #tpu.memory_space<vmem>>, %arg12: memref<1x8xf32, #tpu.memory_space<vmem>>, %arg13: memref<1x128x8xf32, #tpu.memory_space<vmem>>) attributes {dimension_semantics = [#tpu.dimension_semantics<parallel>, #tpu.dimension_semantics<parallel>], iteration_bounds = array<i64: 2, 2>, scalar_prefetch = 0 : i64, scratch_operands = 0 : i64, tpu.core_type = #tpu.core_type<tc>, window_params = [{transform_indices = @transform_0, window_bounds = array<i64: 1, 128, 8>}, {transform_indices = @transform_1, window_bounds = array<i64: 1, 1, 16, 8>}, {transform_indices = @transform_2, window_bounds = array<i64: 1, 1, 16, 8>}, {pipeline_mode = #tpu.pipeline_mode<synchronous>, transform_indices = @transform_3, window_bounds = array<i64: 8, 48>}, {pipeline_mode = #tpu.pipeline_mode<synchronous>, transform_indices = @transform_4, window_bounds = array<i64: 1, 48>}, {pipeline_mode = #tpu.pipeline_mode<synchronous>, transform_indices = @transform_5, window_bounds = array<i64: 1, 48>}, {pipeline_mode = #tpu.pipeline_mode<synchronous>, transform_indices = @transform_6, window_bounds = array<i64: 9, 48>}, {pipeline_mode = #tpu.pipeline_mode<synchronous>, transform_indices = @transform_7, window_bounds = array<i64: 1, 48>}, {pipeline_mode = #tpu.pipeline_mode<synchronous>, transform_indices = @transform_8, window_bounds = array<i64: 48, 8>}, {pipeline_mode = #tpu.pipeline_mode<synchronous>, transform_indices = @transform_9, window_bounds = array<i64: 1, 8>}, {pipeline_mode = #tpu.pipeline_mode<synchronous>, transform_indices = @transform_10, window_bounds = array<i64: 1, 8>}, {transform_indices = @transform_11, window_bounds = array<i64: 1, 128, 8>}]} {
    %c0 = arith.constant 0 : index
    %c0_0 = arith.constant 0 : index
    %c0_1 = arith.constant 0 : index
    %0 = vector.load %arg2[%c0, %c0_0, %c0_1] : memref<1x128x8xbf16, #tpu.memory_space<vmem>>, vector<1x128x8xbf16>
    %1 = vector.shape_cast %0 : vector<1x128x8xbf16> to vector<128x8xbf16>
    %c0_2 = arith.constant 0 : index
    %c0_3 = arith.constant 0 : index
    %c0_4 = arith.constant 0 : index
    %c0_5 = arith.constant 0 : index
    %2 = vector.load %arg3[%c0_2, %c0_3, %c0_4, %c0_5] : memref<1x1x16x8xbf16, #tpu.memory_space<vmem>>, vector<1x1x16x8xbf16>
    %3 = vector.shape_cast %2 : vector<1x1x16x8xbf16> to vector<16x8xbf16>
    %c0_6 = arith.constant 0 : index
    %c0_7 = arith.constant 0 : index
    %c0_8 = arith.constant 0 : index
    %c0_9 = arith.constant 0 : index
    %4 = vector.load %arg4[%c0_6, %c0_7, %c0_8, %c0_9] : memref<1x1x16x8xbf16, #tpu.memory_space<vmem>>, vector<1x1x16x8xbf16>
    %5 = vector.shape_cast %4 : vector<1x1x16x8xbf16> to vector<16x8xbf16>
    %6 = tpu.concatenate %3, %1, %5 in 0 : vector<16x8xbf16>, vector<128x8xbf16>, vector<16x8xbf16> -> vector<160x8xbf16>
    %c0_10 = arith.constant 0 : index
    %c0_11 = arith.constant 0 : index
    %7 = vector.load %arg5[%c0_10, %c0_11] : memref<8x48xbf16, #tpu.memory_space<vmem>>, vector<8x48xbf16>
    %cst = arith.constant dense<0.000000e+00> : vector<160x48xf32>
    %8 = tpu.matmul %6, %7, %cst {dimension_numbers = #tpu.dot_dimension_numbers<[1], [0], [0], [1], [0, 0, 1, 1], [], []>} : vector<160x8xbf16>, vector<8x48xbf16>, vector<160x48xf32> -> vector<160x48xf32>
    %c0_12 = arith.constant 0 : index
    %c0_13 = arith.constant 0 : index
    %9 = vector.load %arg6[%c0_12, %c0_13] : memref<1x48xf32, #tpu.memory_space<vmem>>, vector<1x48xf32>
    %10 = vector.broadcast %9 : vector<1x48xf32> to vector<160x48xf32>
    %11 = arith.mulf %8, %10 : vector<160x48xf32>
    %c0_14 = arith.constant 0 : index
    %c0_15 = arith.constant 0 : index
    %12 = vector.load %arg7[%c0_14, %c0_15] : memref<1x48xf32, #tpu.memory_space<vmem>>, vector<1x48xf32>
    %13 = vector.broadcast %12 : vector<1x48xf32> to vector<160x48xf32>
    %14 = arith.addf %11, %13 : vector<160x48xf32>
    %cst_16 = arith.constant 0.000000e+00 : f32
    %cst_17 = arith.constant 6.000000e+00 : f32
    %15 = vector.broadcast %cst_16 : f32 to vector<160x48xf32>
    %16 = arith.maximumf %15, %14 : vector<160x48xf32>
    %17 = vector.broadcast %cst_17 : f32 to vector<160x48xf32>
    %18 = arith.minimumf %17, %16 : vector<160x48xf32>
    %19 = tpu.iota {dimensions = array<i32: 0>} : vector<160x1xi32>
    %c16_i32 = arith.constant 16 : i32
    %20 = vector.broadcast %c16_i32 : i32 to vector<160x1xi32>
    %21 = arith.cmpi slt, %19, %20 : vector<160x1xi32>
    %c0_i32 = arith.constant 0 : i32
    %22 = arith.cmpi eq, %arg1, %c0_i32 : i32
    %23 = vector.broadcast %22 : i1 to vector<160x1xi1>
    %24 = arith.andi %21, %23 : vector<160x1xi1>
    %c144_i32 = arith.constant 144 : i32
    %25 = vector.broadcast %c144_i32 : i32 to vector<160x1xi32>
    %26 = arith.cmpi sge, %19, %25 : vector<160x1xi32>
    %c1_i32 = arith.constant 1 : i32
    %27 = arith.cmpi eq, %arg1, %c1_i32 : i32
    %28 = vector.broadcast %27 : i1 to vector<160x1xi1>
    %29 = arith.andi %26, %28 : vector<160x1xi1>
    %30 = arith.ori %24, %29 : vector<160x1xi1>
    %cst_18 = arith.constant 0.000000e+00 : f32
    %31 = vector.shape_cast %30 : vector<160x1xi1> to vector<160x1xi1>
    %32 = vector.broadcast %31 : vector<160x1xi1> to vector<160x48xi1>
    %33 = vector.broadcast %cst_18 : f32 to vector<160x48xf32>
    %34 = arith.select %32, %33, %18 : vector<160x48xi1>, vector<160x48xf32>
    %35 = tpu.iota {dimensions = array<i32: 0>} : vector<160x1xi32>
    %c16_i32_19 = arith.constant 16 : i32
    %c0_i32_20 = arith.constant 0 : i32
    %36 = arith.cmpi eq, %c16_i32_19, %c0_i32_20 : i32
    %c1_i32_21 = arith.constant 1 : i32
    %37 = arith.select %36, %c1_i32_21, %c16_i32_19 : i32
    %38 = vector.broadcast %37 : i32 to vector<160x1xi32>
    %39 = arith.remsi %35, %38 : vector<160x1xi32>
    %c0_i32_22 = arith.constant 0 : i32
    %40 = vector.broadcast %c0_i32_22 : i32 to vector<160x1xi32>
    %41 = arith.cmpi ne, %39, %40 : vector<160x1xi32>
    %c0_i32_23 = arith.constant 0 : i32
    %42 = vector.broadcast %c0_i32_23 : i32 to vector<160x1xi32>
    %43 = arith.cmpi slt, %39, %42 : vector<160x1xi32>
    %c0_i32_24 = arith.constant 0 : i32
    %44 = arith.cmpi slt, %37, %c0_i32_24 : i32
    %45 = vector.broadcast %44 : i1 to vector<160x1xi1>
    %46 = vector.broadcast %45 : vector<160x1xi1> to vector<160x1xi1>
    %47 = arith.xori %43, %46 : vector<160x1xi1>
    %48 = arith.andi %47, %41 : vector<160x1xi1>
    %49 = vector.broadcast %37 : i32 to vector<160x1xi32>
    %50 = arith.addi %39, %49 : vector<160x1xi32>
    %51 = arith.select %48, %50, %39 : vector<160x1xi1>, vector<160x1xi32>
    %c0_i32_25 = arith.constant 0 : i32
    %52 = vector.broadcast %c0_i32_25 : i32 to vector<160x1xi32>
    %53 = arith.cmpi sgt, %51, %52 : vector<160x1xi32>
    %c1_i32_26 = arith.constant 1 : i32
    %54 = tpu.dynamic_rotate %34 by %c1_i32_26 dim 0 : vector<160x48xf32>, i32 -> vector<160x48xf32>
    %cst_27 = arith.constant 0.000000e+00 : f32
    %55 = vector.shape_cast %53 : vector<160x1xi1> to vector<160x1xi1>
    %56 = vector.broadcast %55 : vector<160x1xi1> to vector<160x48xi1>
    %57 = vector.broadcast %cst_27 : f32 to vector<160x48xf32>
    %58 = arith.select %56, %54, %57 : vector<160x48xi1>, vector<160x48xf32>
    %c15_i32 = arith.constant 15 : i32
    %59 = vector.broadcast %c15_i32 : i32 to vector<160x1xi32>
    %60 = arith.cmpi slt, %51, %59 : vector<160x1xi32>
    %c159_i32 = arith.constant 159 : i32
    %61 = tpu.dynamic_rotate %34 by %c159_i32 dim 0 : vector<160x48xf32>, i32 -> vector<160x48xf32>
    %cst_28 = arith.constant 0.000000e+00 : f32
    %62 = vector.shape_cast %60 : vector<160x1xi1> to vector<160x1xi1>
    %63 = vector.broadcast %62 : vector<160x1xi1> to vector<160x48xi1>
    %64 = vector.broadcast %cst_28 : f32 to vector<160x48xf32>
    %65 = arith.select %63, %61, %64 : vector<160x48xi1>, vector<160x48xf32>
    %c0_29 = arith.constant 0 : index
    %c0_30 = arith.constant 0 : index
    %66 = vector.load %arg8[%c0_29, %c0_30] : memref<9x48xf32, #tpu.memory_space<vmem>>, vector<9x48xf32>
    %cst_31 = arith.constant 0.000000e+00 : f32
    %67 = vector.broadcast %cst_31 : f32 to vector<128x48xf32>
    %68 = vector.extract_strided_slice %58 {offsets = [0, 0], sizes = [128, 48], strides = [1, 1]} : vector<160x48xf32> to vector<128x48xf32>
    %69 = vector.extract_strided_slice %66 {offsets = [0, 0], sizes = [1, 48], strides = [1, 1]} : vector<9x48xf32> to vector<1x48xf32>
    %70 = vector.broadcast %69 : vector<1x48xf32> to vector<128x48xf32>
    %71 = arith.mulf %68, %70 : vector<128x48xf32>
    %72 = arith.addf %67, %71 : vector<128x48xf32>
    %73 = vector.extract_strided_slice %58 {offsets = [16, 0], sizes = [128, 48], strides = [1, 1]} : vector<160x48xf32> to vector<128x48xf32>
    %74 = vector.extract_strided_slice %66 {offsets = [3, 0], sizes = [1, 48], strides = [1, 1]} : vector<9x48xf32> to vector<1x48xf32>
    %75 = vector.broadcast %74 : vector<1x48xf32> to vector<128x48xf32>
    %76 = arith.mulf %73, %75 : vector<128x48xf32>
    %77 = arith.addf %72, %76 : vector<128x48xf32>
    %78 = vector.extract_strided_slice %58 {offsets = [32, 0], sizes = [128, 48], strides = [1, 1]} : vector<160x48xf32> to vector<128x48xf32>
    %79 = vector.extract_strided_slice %66 {offsets = [6, 0], sizes = [1, 48], strides = [1, 1]} : vector<9x48xf32> to vector<1x48xf32>
    %80 = vector.broadcast %79 : vector<1x48xf32> to vector<128x48xf32>
    %81 = arith.mulf %78, %80 : vector<128x48xf32>
    %82 = arith.addf %77, %81 : vector<128x48xf32>
    %83 = vector.extract_strided_slice %34 {offsets = [0, 0], sizes = [128, 48], strides = [1, 1]} : vector<160x48xf32> to vector<128x48xf32>
    %84 = vector.extract_strided_slice %66 {offsets = [1, 0], sizes = [1, 48], strides = [1, 1]} : vector<9x48xf32> to vector<1x48xf32>
    %85 = vector.broadcast %84 : vector<1x48xf32> to vector<128x48xf32>
    %86 = arith.mulf %83, %85 : vector<128x48xf32>
    %87 = arith.addf %82, %86 : vector<128x48xf32>
    %88 = vector.extract_strided_slice %34 {offsets = [16, 0], sizes = [128, 48], strides = [1, 1]} : vector<160x48xf32> to vector<128x48xf32>
    %89 = vector.extract_strided_slice %66 {offsets = [4, 0], sizes = [1, 48], strides = [1, 1]} : vector<9x48xf32> to vector<1x48xf32>
    %90 = vector.broadcast %89 : vector<1x48xf32> to vector<128x48xf32>
    %91 = arith.mulf %88, %90 : vector<128x48xf32>
    %92 = arith.addf %87, %91 : vector<128x48xf32>
    %93 = vector.extract_strided_slice %34 {offsets = [32, 0], sizes = [128, 48], strides = [1, 1]} : vector<160x48xf32> to vector<128x48xf32>
    %94 = vector.extract_strided_slice %66 {offsets = [7, 0], sizes = [1, 48], strides = [1, 1]} : vector<9x48xf32> to vector<1x48xf32>
    %95 = vector.broadcast %94 : vector<1x48xf32> to vector<128x48xf32>
    %96 = arith.mulf %93, %95 : vector<128x48xf32>
    %97 = arith.addf %92, %96 : vector<128x48xf32>
    %98 = vector.extract_strided_slice %65 {offsets = [0, 0], sizes = [128, 48], strides = [1, 1]} : vector<160x48xf32> to vector<128x48xf32>
    %99 = vector.extract_strided_slice %66 {offsets = [2, 0], sizes = [1, 48], strides = [1, 1]} : vector<9x48xf32> to vector<1x48xf32>
    %100 = vector.broadcast %99 : vector<1x48xf32> to vector<128x48xf32>
    %101 = arith.mulf %98, %100 : vector<128x48xf32>
    %102 = arith.addf %97, %101 : vector<128x48xf32>
    %103 = vector.extract_strided_slice %65 {offsets = [16, 0], sizes = [128, 48], strides = [1, 1]} : vector<160x48xf32> to vector<128x48xf32>
    %104 = vector.extract_strided_slice %66 {offsets = [5, 0], sizes = [1, 48], strides = [1, 1]} : vector<9x48xf32> to vector<1x48xf32>
    %105 = vector.broadcast %104 : vector<1x48xf32> to vector<128x48xf32>
    %106 = arith.mulf %103, %105 : vector<128x48xf32>
    %107 = arith.addf %102, %106 : vector<128x48xf32>
    %108 = vector.extract_strided_slice %65 {offsets = [32, 0], sizes = [128, 48], strides = [1, 1]} : vector<160x48xf32> to vector<128x48xf32>
    %109 = vector.extract_strided_slice %66 {offsets = [8, 0], sizes = [1, 48], strides = [1, 1]} : vector<9x48xf32> to vector<1x48xf32>
    %110 = vector.broadcast %109 : vector<1x48xf32> to vector<128x48xf32>
    %111 = arith.mulf %108, %110 : vector<128x48xf32>
    %112 = arith.addf %107, %111 : vector<128x48xf32>
    %c0_32 = arith.constant 0 : index
    %c0_33 = arith.constant 0 : index
    %113 = vector.load %arg9[%c0_32, %c0_33] : memref<1x48xf32, #tpu.memory_space<vmem>>, vector<1x48xf32>
    %114 = vector.broadcast %113 : vector<1x48xf32> to vector<128x48xf32>
    %115 = arith.addf %112, %114 : vector<128x48xf32>
    %cst_34 = arith.constant 0.000000e+00 : f32
    %cst_35 = arith.constant 6.000000e+00 : f32
    %116 = vector.broadcast %cst_34 : f32 to vector<128x48xf32>
    %117 = arith.maximumf %116, %115 : vector<128x48xf32>
    %118 = vector.broadcast %cst_35 : f32 to vector<128x48xf32>
    %119 = arith.minimumf %118, %117 : vector<128x48xf32>
    %120 = arith.truncf %119 : vector<128x48xf32> to vector<128x48xbf16>
    %c0_36 = arith.constant 0 : index
    %c0_37 = arith.constant 0 : index
    %121 = vector.load %arg10[%c0_36, %c0_37] : memref<48x8xbf16, #tpu.memory_space<vmem>>, vector<48x8xbf16>
    %cst_38 = arith.constant dense<0.000000e+00> : vector<128x8xf32>
    %122 = tpu.matmul %120, %121, %cst_38 {dimension_numbers = #tpu.dot_dimension_numbers<[1], [0], [0], [1], [0, 0, 1, 1], [], []>} : vector<128x48xbf16>, vector<48x8xbf16>, vector<128x8xf32> -> vector<128x8xf32>
    %c0_39 = arith.constant 0 : index
    %c0_40 = arith.constant 0 : index
    %123 = vector.load %arg11[%c0_39, %c0_40] : memref<1x8xf32, #tpu.memory_space<vmem>>, vector<1x8xf32>
    %124 = vector.broadcast %123 : vector<1x8xf32> to vector<128x8xf32>
    %125 = arith.mulf %122, %124 : vector<128x8xf32>
    %c0_41 = arith.constant 0 : index
    %c0_42 = arith.constant 0 : index
    %126 = vector.load %arg12[%c0_41, %c0_42] : memref<1x8xf32, #tpu.memory_space<vmem>>, vector<1x8xf32>
    %127 = vector.broadcast %126 : vector<1x8xf32> to vector<128x8xf32>
    %128 = arith.addf %125, %127 : vector<128x8xf32>
    %129 = arith.extf %1 : vector<128x8xbf16> to vector<128x8xf32>
    %130 = arith.addf %128, %129 : vector<128x8xf32>
    %c0_43 = arith.constant 0 : index
    %c0_44 = arith.constant 0 : index
    %c0_45 = arith.constant 0 : index
    %131 = vector.load %arg13[%c0_43, %c0_44, %c0_45] : memref<1x128x8xf32, #tpu.memory_space<vmem>>, vector<1x128x8xf32>
    %132 = vector.shape_cast %131 : vector<1x128x8xf32> to vector<128x8xf32>
    %133 = vector.shape_cast %130 : vector<128x8xf32> to vector<1x128x8xf32>
    tpu.vector_store %arg13[%c0_43, %c0_44, %c0_45], %133 {strides = array<i32>} : memref<1x128x8xf32, #tpu.memory_space<vmem>>, vector<1x128x8xf32>,
    return
  }
  func.func @transform_0(%arg0: i32, %arg1: i32) -> (i32, i32, i32) {
    %c0_i32 = arith.constant 0 : i32
    %c0_i32_0 = arith.constant 0 : i32
    return %arg0, %arg1, %c0_i32 : i32, i32, i32
  }
  func.func @transform_1(%arg0: i32, %arg1: i32) -> (i32, i32, i32, i32) {
    %c0_i32 = arith.constant 0 : i32
    %c0_i32_0 = arith.constant 0 : i32
    %c0_i32_1 = arith.constant 0 : i32
    return %arg0, %arg1, %c0_i32, %c0_i32_0 : i32, i32, i32, i32
  }
  func.func @transform_2(%arg0: i32, %arg1: i32) -> (i32, i32, i32, i32) {
    %c0_i32 = arith.constant 0 : i32
    %c0_i32_0 = arith.constant 0 : i32
    %c0_i32_1 = arith.constant 0 : i32
    return %arg0, %arg1, %c0_i32, %c0_i32_0 : i32, i32, i32, i32
  }
  func.func @transform_3(%arg0: i32, %arg1: i32) -> (i32, i32) {
    %c0_i32 = arith.constant 0 : i32
    %c0_i32_0 = arith.constant 0 : i32
    %c0_i32_1 = arith.constant 0 : i32
    return %c0_i32, %c0_i32_0 : i32, i32
  }
  func.func @transform_4(%arg0: i32, %arg1: i32) -> (i32, i32) {
    %c0_i32 = arith.constant 0 : i32
    %c0_i32_0 = arith.constant 0 : i32
    %c0_i32_1 = arith.constant 0 : i32
    return %c0_i32, %c0_i32_0 : i32, i32
  }
  func.func @transform_5(%arg0: i32, %arg1: i32) -> (i32, i32) {
    %c0_i32 = arith.constant 0 : i32
    %c0_i32_0 = arith.constant 0 : i32
    %c0_i32_1 = arith.constant 0 : i32
    return %c0_i32, %c0_i32_0 : i32, i32
  }
  func.func @transform_6(%arg0: i32, %arg1: i32) -> (i32, i32) {
    %c0_i32 = arith.constant 0 : i32
    %c0_i32_0 = arith.constant 0 : i32
    %c0_i32_1 = arith.constant 0 : i32
    return %c0_i32, %c0_i32_0 : i32, i32
  }
  func.func @transform_7(%arg0: i32, %arg1: i32) -> (i32, i32) {
    %c0_i32 = arith.constant 0 : i32
    %c0_i32_0 = arith.constant 0 : i32
    %c0_i32_1 = arith.constant 0 : i32
    return %c0_i32, %c0_i32_0 : i32, i32
  }
  func.func @transform_8(%arg0: i32, %arg1: i32) -> (i32, i32) {
    %c0_i32 = arith.constant 0 : i32
    %c0_i32_0 = arith.constant 0 : i32
    %c0_i32_1 = arith.constant 0 : i32
    return %c0_i32, %c0_i32_0 : i32, i32
  }
  func.func @transform_9(%arg0: i32, %arg1: i32) -> (i32, i32) {
    %c0_i32 = arith.constant 0 : i32
    %c0_i32_0 = arith.constant 0 : i32
    %c0_i32_1 = arith.constant 0 : i32
    return %c0_i32, %c0_i32_0 : i32, i32
  }
  func.func @transform_10(%arg0: i32, %arg1: i32) -> (i32, i32) {
    %c0_i32 = arith.constant 0 : i32
    %c0_i32_0 = arith.constant 0 : i32
    %c0_i32_1 = arith.constant 0 : i32
    return %c0_i32, %c0_i32_0 : i32, i32
  }
  func.func @transform_11(%arg0: i32, %arg1: i32) -> (i32, i32, i32) {
    %c0_i32 = arith.constant 0 : i32
    %c0_i32_0 = arith.constant 0 : i32
    return %arg0, %arg1, %c0_i32 : i32, i32, i32
  }
}

</mosaic_0001>

<llo_original>
// kernel: tpu_custom_call.1
$region0: #{tpu_custom_call.1}
  #allocation0 [shape = 'u32[]', space=smem, size = 0x4, offset = 0x4, fixed_abs, tag = 'smem constant byte address 0x4 - core index']
  #allocation1 [shape = 'u32[144,128]{1,0:T(1,128)}', space=vmem, size = 0x12000, scoped, tag = 'internal scratch']
  %s0 = inlined_call_operand.vmem [shape: bf16[2,256,8], index: 0, kind: input, shape index: {}]
  %s1 = inlined_call_operand.vmem [shape: bf16[2,2,16,8], index: 1, kind: input, shape index: {}]
  %s2 = inlined_call_operand.vmem [shape: bf16[2,2,16,8], index: 2, kind: input, shape index: {}]
  %s3 = inlined_call_operand.vmem [shape: bf16[8,48], index: 3, kind: input, shape index: {}]
  %s4 = inlined_call_operand.vmem [shape: f32[1,48], index: 4, kind: input, shape index: {}]
  %s5 = inlined_call_operand.vmem [shape: f32[1,48], index: 5, kind: input, shape index: {}]
  %s6 = inlined_call_operand.vmem [shape: f32[9,48], index: 6, kind: input, shape index: {}]
  %s7 = inlined_call_operand.vmem [shape: f32[1,48], index: 7, kind: input, shape index: {}]
  %s8 = inlined_call_operand.vmem [shape: bf16[48,8], index: 8, kind: input, shape index: {}]
  %s9 = inlined_call_operand.vmem [shape: f32[1,8], index: 9, kind: input, shape index: {}]
  %s10 = inlined_call_operand.vmem [shape: f32[1,8], index: 10, kind: input, shape index: {}]
  %s11 = inlined_call_operand.vmem [shape: f32[2,256,8], index: 11, kind: output, shape index: {}]
  %s12 = sld [smem:[#allocation0]]
  $region77: #{tpu_custom_call.1} parent=0
    _
  %s14 = ssub.s32 1, %s12
  %s15 = scalar_select 0, %s14, %s12
  loop: start=0, step=1, limit=6
  $region2: #{tpu_custom_call.1} parent=0 // loop_pre_header
    _
  $region3: #{tpu_custom_call.1} parent=0 // loop_header
    %s17 = sphi 0, %s21
    %p18 = scmp.ge.s32.totalorder %s17, 6
    %s24 = sphi 0, %s36
    %s25 = sphi 0, %s32
    %s26 = sphi 0, %s24
    %s27 = sphi 0, %s25
    %s28 = sphi 0, %s26
    %s29 = sphi 0, %s27
    %s41 = sphi 0, %s43
    %s44 = sphi 0, %s41
    %s45 = sphi 0, %s44
    %s61 = sphi 0, %s45
    %s69 = sphi 0, %s71
    %s72 = sphi 0, %s69
    %s73 = sphi 0, %s72
    %s89 = sphi 0, %s73
    %s97 = sphi 0, %s99
    %s100 = sphi 0, %s97
    %s101 = sphi 0, %s100
    %s117 = sphi 0, %s101
    %s121 = sphi 0, %s121
    %s123 = sphi 0, %s121
    %s124 = sphi 0, %s123
    %s138 = sphi 0, %s124
    %s142 = sphi 0, %s142
    %s144 = sphi 0, %s142
    %s145 = sphi 0, %s144
    %s159 = sphi 0, %s145
    %s163 = sphi 0, %s163
    %s165 = sphi 0, %s163
    %s166 = sphi 0, %s165
    %s180 = sphi 0, %s166
    %s184 = sphi 0, %s184
    %s186 = sphi 0, %s184
    %s187 = sphi 0, %s186
    %s201 = sphi 0, %s187
    %s205 = sphi 0, %s205
    %s207 = sphi 0, %s205
    %s208 = sphi 0, %s207
    %s222 = sphi 0, %s208
    %s226 = sphi 0, %s226
    %s228 = sphi 0, %s226
    %s229 = sphi 0, %s228
    %s243 = sphi 0, %s229
    %s247 = sphi 0, %s247
    %s249 = sphi 0, %s247
    %s250 = sphi 0, %s249
    %s264 = sphi 0, %s250
    %s268 = sphi 0, %s268
    %s270 = sphi 0, %s268
    %s271 = sphi 0, %s270
    %s285 = sphi 0, %s271
    %s293 = sphi 0, %s295
    %s296 = sphi 0, %s293
    %s297 = sphi 0, %s296
    %s313 = sphi 0, %s297
  $region4: #{tpu_custom_call.1} parent=0 // loop_header_branch
    %20 = sbr.rel (%p18) target = $region8
  $region5: #{tpu_custom_call.1} parent=0 // loop_body
    %s22 = ssub.s32 %s17, 1
    %s23 = ssub.s32 %s17, 2
    %s30 = sadd.s32 1, %s25
    %p31 = scmp.ge.s32.totalorder %s30, 2
    %s32 = scalar_select %p31, 0, %s30
    %s33 = sadd.s32 1, %s24
    %s34 = scalar_select %p31, %s33, %s24
    %p35 = scmp.ge.s32.totalorder %s34, 2
    %s36 = scalar_select %p35, 0, %s34
    %s37 = ssub.s32 %s24, %s36
    %s38 = ssub.s32 %s25, %s32
    %s39 = sor.u32 %s37, %s38
    %p40 = scmp.eq.s32.totalorder %s39, 0
    %s42 = sadd.s32 %s41, 1
    %s43 = scalar_select %p40, %s41, %s42
    %p46 = pneg %p40
    %p47 = scmp.eq.s32.totalorder %s17, 3
    %p48 = por %p46, %p47
    %p49 = scmp.ne.s32.totalorder %s41, %s44
    %p50 = scmp.eq.s32.totalorder %s17, 0
    %p51 = por %p49, %p50
    %p52 = scmp.ne.s32.totalorder %s41, %s44
    %p53 = scmp.eq.s32.totalorder %s22, 3
    %p54 = por %p52, %p53
    %p55 = scmp.ne.s32.totalorder %s44, %s45
    %p56 = scmp.eq.s32.totalorder %s22, 0
    %p57 = por %p55, %p56
    %p58 = scmp.ne.s32.totalorder %s44, %s45
    %p59 = scmp.eq.s32.totalorder %s23, 3
    %p60 = por %p58, %p59
    %p62 = scmp.ne.s32.totalorder %s45, %s61
    %p63 = scmp.eq.s32.totalorder %s23, 0
    %p64 = por %p62, %p63
    %s65 = ssub.s32 %s24, %s36
    %s66 = ssub.s32 %s25, %s32
    %s67 = sor.u32 %s65, %s66
    %p68 = scmp.eq.s32.totalorder %s67, 0
    %s70 = sadd.s32 %s69, 1
    %s71 = scalar_select %p68, %s69, %s70
    %p74 = pneg %p68
    %p75 = scmp.eq.s32.totalorder %s17, 3
    %p76 = por %p74, %p75
    %p77 = scmp.ne.s32.totalorder %s69, %s72
    %p78 = scmp.eq.s32.totalorder %s17, 0
    %p79 = por %p77, %p78
    %p80 = scmp.ne.s32.totalorder %s69, %s72
    %p81 = scmp.eq.s32.totalorder %s22, 3
    %p82 = por %p80, %p81
    %p83 = scmp.ne.s32.totalorder %s72, %s73
    %p84 = scmp.eq.s32.totalorder %s22, 0
    %p85 = por %p83, %p84
    %p86 = scmp.ne.s32.totalorder %s72, %s73
    %p87 = scmp.eq.s32.totalorder %s23, 3
    %p88 = por %p86, %p87
    %p90 = scmp.ne.s32.totalorder %s73, %s89
    %p91 = scmp.eq.s32.totalorder %s23, 0
    %p92 = por %p90, %p91
    %s93 = ssub.s32 %s24, %s36
    %s94 = ssub.s32 %s25, %s32
    %s95 = sor.u32 %s93, %s94
    %p96 = scmp.eq.s32.totalorder %s95, 0
    %s98 = sadd.s32 %s97, 1
    %s99 = scalar_select %p96, %s97, %s98
    %p102 = pneg %p96
    %p103 = scmp.eq.s32.totalorder %s17, 3
    %p104 = por %p102, %p103
    %p105 = scmp.ne.s32.totalorder %s97, %s100
    %p106 = scmp.eq.s32.totalorder %s17, 0
    %p107 = por %p105, %p106
    %p108 = scmp.ne.s32.totalorder %s97, %s100
    %p109 = scmp.eq.s32.totalorder %s22, 3
    %p110 = por %p108, %p109
    %p111 = scmp.ne.s32.totalorder %s100, %s101
    %p112 = scmp.eq.s32.totalorder %s22, 0
    %p113 = por %p111, %p112
    %p114 = scmp.ne.s32.totalorder %s100, %s101
    %p115 = scmp.eq.s32.totalorder %s23, 3
    %p116 = por %p114, %p115
    %p118 = scmp.ne.s32.totalorder %s101, %s117
    %p119 = scmp.eq.s32.totalorder %s23, 0
    %p120 = por %p118, %p119
    %s122 = sadd.s32 %s121, 1
    %p125 = scmp.eq.s32.totalorder %s17, 3
    %p126 = scmp.ne.s32.totalorder %s121, %s123
    %p127 = scmp.eq.s32.totalorder %s17, 0
    %p128 = por %p126, %p127
    %p129 = scmp.ne.s32.totalorder %s121, %s123
    %p130 = scmp.eq.s32.totalorder %s22, 3
    %p131 = por %p129, %p130
    %p132 = scmp.ne.s32.totalorder %s123, %s124
    %p133 = scmp.eq.s32.totalorder %s22, 0
    %p134 = por %p132, %p133
    %p135 = scmp.ne.s32.totalorder %s123, %s124
    %p136 = scmp.eq.s32.totalorder %s23, 3
    %p137 = por %p135, %p136
    %p139 = scmp.ne.s32.totalorder %s124, %s138
    %p140 = scmp.eq.s32.totalorder %s23, 0
    %p141 = por %p139, %p140
    %s143 = sadd.s32 %s142, 1
    %p146 = scmp.eq.s32.totalorder %s17, 3
    %p147 = scmp.ne.s32.totalorder %s142, %s144
    %p148 = scmp.eq.s32.totalorder %s17, 0
    %p149 = por %p147, %p148
    %p150 = scmp.ne.s32.totalorder %s142, %s144
    %p151 = scmp.eq.s32.totalorder %s22, 3
    %p152 = por %p150, %p151
    %p153 = scmp.ne.s32.totalorder %s144, %s145
    %p154 = scmp.eq.s32.totalorder %s22, 0
    %p155 = por %p153, %p154
    %p156 = scmp.ne.s32.totalorder %s144, %s145
    %p157 = scmp.eq.s32.totalorder %s23, 3
    %p158 = por %p156, %p157
    %p160 = scmp.ne.s32.totalorder %s145, %s159
    %p161 = scmp.eq.s32.totalorder %s23, 0
    %p162 = por %p160, %p161
    %s164 = sadd.s32 %s163, 1
    %p167 = scmp.eq.s32.totalorder %s17, 3
    %p168 = scmp.ne.s32.totalorder %s163, %s165
    %p169 = scmp.eq.s32.totalorder %s17, 0
    %p170 = por %p168, %p169
    %p171 = scmp.ne.s32.totalorder %s163, %s165
    %p172 = scmp.eq.s32.totalorder %s22, 3
    %p173 = por %p171, %p172
    %p174 = scmp.ne.s32.totalorder %s165, %s166
    %p175 = scmp.eq.s32.totalorder %s22, 0
    %p176 = por %p174, %p175
    %p177 = scmp.ne.s32.totalorder %s165, %s166
    %p178 = scmp.eq.s32.totalorder %s23, 3
    %p179 = por %p177, %p178
    %p181 = scmp.ne.s32.totalorder %s166, %s180
    %p182 = scmp.eq.s32.totalorder %s23, 0
    %p183 = por %p181, %p182
    %s185 = sadd.s32 %s184, 1
    %p188 = scmp.eq.s32.totalorder %s17, 3
    %p189 = scmp.ne.s32.totalorder %s184, %s186
    %p190 = scmp.eq.s32.totalorder %s17, 0
    %p191 = por %p189, %p190
    %p192 = scmp.ne.s32.totalorder %s184, %s186
    %p193 = scmp.eq.s32.totalorder %s22, 3
    %p194 = por %p192, %p193
    %p195 = scmp.ne.s32.totalorder %s186, %s187
    %p196 = scmp.eq.s32.totalorder %s22, 0
    %p197 = por %p195, %p196
    %p198 = scmp.ne.s32.totalorder %s186, %s187
    %p199 = scmp.eq.s32.totalorder %s23, 3
    %p200 = por %p198, %p199
    %p202 = scmp.ne.s32.totalorder %s187, %s201
    %p203 = scmp.eq.s32.totalorder %s23, 0
    %p204 = por %p202, %p203
    %s206 = sadd.s32 %s205, 1
    %p209 = scmp.eq.s32.totalorder %s17, 3
    %p210 = scmp.ne.s32.totalorder %s205, %s207
    %p211 = scmp.eq.s32.totalorder %s17, 0
    %p212 = por %p210, %p211
    %p213 = scmp.ne.s32.totalorder %s205, %s207
    %p214 = scmp.eq.s32.totalorder %s22, 3
    %p215 = por %p213, %p214
    %p216 = scmp.ne.s32.totalorder %s207, %s208
    %p217 = scmp.eq.s32.totalorder %s22, 0
    %p218 = por %p216, %p217
    %p219 = scmp.ne.s32.totalorder %s207, %s208
    %p220 = scmp.eq.s32.totalorder %s23, 3
    %p221 = por %p219, %p220
    %p223 = scmp.ne.s32.totalorder %s208, %s222
    %p224 = scmp.eq.s32.totalorder %s23, 0
    %p225 = por %p223, %p224
    %s227 = sadd.s32 %s226, 1
    %p230 = scmp.eq.s32.totalorder %s17, 3
    %p231 = scmp.ne.s32.totalorder %s226, %s228
    %p232 = scmp.eq.s32.totalorder %s17, 0
    %p233 = por %p231, %p232
    %p234 = scmp.ne.s32.totalorder %s226, %s228
    %p235 = scmp.eq.s32.totalorder %s22, 3
    %p236 = por %p234, %p235
    %p237 = scmp.ne.s32.totalorder %s228, %s229
    %p238 = scmp.eq.s32.totalorder %s22, 0
    %p239 = por %p237, %p238
    %p240 = scmp.ne.s32.totalorder %s228, %s229
    %p241 = scmp.eq.s32.totalorder %s23, 3
    %p242 = por %p240, %p241
    %p244 = scmp.ne.s32.totalorder %s229, %s243
    %p245 = scmp.eq.s32.totalorder %s23, 0
    %p246 = por %p244, %p245
    %s248 = sadd.s32 %s247, 1
    %p251 = scmp.eq.s32.totalorder %s17, 3
    %p252 = scmp.ne.s32.totalorder %s247, %s249
    %p253 = scmp.eq.s32.totalorder %s17, 0
    %p254 = por %p252, %p253
    %p255 = scmp.ne.s32.totalorder %s247, %s249
    %p256 = scmp.eq.s32.totalorder %s22, 3
    %p257 = por %p255, %p256
    %p258 = scmp.ne.s32.totalorder %s249, %s250
    %p259 = scmp.eq.s32.totalorder %s22, 0
    %p260 = por %p258, %p259
    %p261 = scmp.ne.s32.totalorder %s249, %s250
    %p262 = scmp.eq.s32.totalorder %s23, 3
    %p263 = por %p261, %p262
    %p265 = scmp.ne.s32.totalorder %s250, %s264
    %p266 = scmp.eq.s32.totalorder %s23, 0
    %p267 = por %p265, %p266
    %s269 = sadd.s32 %s268, 1
    %p272 = scmp.eq.s32.totalorder %s17, 3
    %p273 = scmp.ne.s32.totalorder %s268, %s270
    %p274 = scmp.eq.s32.totalorder %s17, 0
    %p275 = por %p273, %p274
    %p276 = scmp.ne.s32.totalorder %s268, %s270
    %p277 = scmp.eq.s32.totalorder %s22, 3
    %p278 = por %p276, %p277
    %p279 = scmp.ne.s32.totalorder %s270, %s271
    %p280 = scmp.eq.s32.totalorder %s22, 0
    %p281 = por %p279, %p280
    %p282 = scmp.ne.s32.totalorder %s270, %s271
    %p283 = scmp.eq.s32.totalorder %s23, 3
    %p284 = por %p282, %p283
    %p286 = scmp.ne.s32.totalorder %s271, %s285
    %p287 = scmp.eq.s32.totalorder %s23, 0
    %p288 = por %p286, %p287
    %s289 = ssub.s32 %s24, %s36
    %s290 = ssub.s32 %s25, %s32
    %s291 = sor.u32 %s289, %s290
    %p292 = scmp.eq.s32.totalorder %s291, 0
    %s294 = sadd.s32 %s293, 1
    %s295 = scalar_select %p292, %s293, %s294
    %p298 = pneg %p292
    %p299 = scmp.eq.s32.totalorder %s17, 3
    %p300 = por %p298, %p299
    %p301 = scmp.ne.s32.totalorder %s293, %s296
    %p302 = scmp.eq.s32.totalorder %s17, 0
    %p303 = por %p301, %p302
    %p304 = scmp.ne.s32.totalorder %s293, %s296
    %p305 = scmp.eq.s32.totalorder %s22, 3
    %p306 = por %p304, %p305
    %p307 = scmp.ne.s32.totalorder %s296, %s297
    %p308 = scmp.eq.s32.totalorder %s22, 0
    %p309 = por %p307, %p308
    %p310 = scmp.ne.s32.totalorder %s296, %s297
    %p311 = scmp.eq.s32.totalorder %s23, 3
    %p312 = por %p310, %p311
    %p314 = scmp.ne.s32.totalorder %s297, %s313
    %p315 = scmp.eq.s32.totalorder %s23, 0
    %p316 = por %p314, %p315
    %p317 = scmp.le.s32.totalorder 1, %s17
    %p318 = scmp.lt.s32.totalorder %s17, 5
    %p319 = pnand %p317, %p318
    %p320 = pneg %p319
    // Predicated region
    $region9: #{tpu_custom_call.1} parent=5 // pred_check
      _
    $region10: #{tpu_custom_call.1} parent=5 // pred_check_branch
      %322 = sbr.rel (%p319) target = $region12
    $region11: #{tpu_custom_call.1} parent=5 // pred_region
      %s323 = ssub.s32 %s17, 1
      // Predicated region
      $region13: #{tpu_custom_call.1} parent=11 // pred_check
        %p324 = pneg %p134
      $region14: #{tpu_custom_call.1} parent=11 // pred_check_branch
        %326 = sbr.rel (%p324) target = $region16
      $region15: #{tpu_custom_call.1} parent=11 // pred_region
        _
      $region16: #{tpu_custom_call.1} parent=11 // pred_fallthru
        _
      // Predicated region
      $region17: #{tpu_custom_call.1} parent=11 // pred_check
        %p327 = pneg %p155
      $region18: #{tpu_custom_call.1} parent=11 // pred_check_branch
        %329 = sbr.rel (%p327) target = $region20
      $region19: #{tpu_custom_call.1} parent=11 // pred_region
        _
      $region20: #{tpu_custom_call.1} parent=11 // pred_fallthru
        _
      // Predicated region
      $region21: #{tpu_custom_call.1} parent=11 // pred_check
        %p330 = pneg %p176
      $region22: #{tpu_custom_call.1} parent=11 // pred_check_branch
        %332 = sbr.rel (%p330) target = $region24
      $region23: #{tpu_custom_call.1} parent=11 // pred_region
        _
      $region24: #{tpu_custom_call.1} parent=11 // pred_fallthru
        _
      // Predicated region
      $region25: #{tpu_custom_call.1} parent=11 // pred_check
        %p333 = pneg %p197
      $region26: #{tpu_custom_call.1} parent=11 // pred_check_branch
        %335 = sbr.rel (%p333) target = $region28
      $region27: #{tpu_custom_call.1} parent=11 // pred_region
        _
      $region28: #{tpu_custom_call.1} parent=11 // pred_fallthru
        _
      // Predicated region
      $region29: #{tpu_custom_call.1} parent=11 // pred_check
        %p336 = pneg %p218
      $region30: #{tpu_custom_call.1} parent=11 // pred_check_branch
        %338 = sbr.rel (%p336) target = $region32
      $region31: #{tpu_custom_call.1} parent=11 // pred_region
        _
      $region32: #{tpu_custom_call.1} parent=11 // pred_fallthru
        _
      // Predicated region
      $region33: #{tpu_custom_call.1} parent=11 // pred_check
        %p339 = pneg %p239
      $region34: #{tpu_custom_call.1} parent=11 // pred_check_branch
        %341 = sbr.rel (%p339) target = $region36
      $region35: #{tpu_custom_call.1} parent=11 // pred_region
        _
      $region36: #{tpu_custom_call.1} parent=11 // pred_fallthru
        _
      // Predicated region
      $region37: #{tpu_custom_call.1} parent=11 // pred_check
        %p342 = pneg %p260
      $region38: #{tpu_custom_call.1} parent=11 // pred_check_branch
        %344 = sbr.rel (%p342) target = $region40
      $region39: #{tpu_custom_call.1} parent=11 // pred_region
        _
      $region40: #{tpu_custom_call.1} parent=11 // pred_fallthru
        _
      // Predicated region
      $region41: #{tpu_custom_call.1} parent=11 // pred_check
        %p345 = pneg %p281
      $region42: #{tpu_custom_call.1} parent=11 // pred_check_branch
        %347 = sbr.rel (%p345) target = $region44
      $region43: #{tpu_custom_call.1} parent=11 // pred_region
        _
      $region44: #{tpu_custom_call.1} parent=11 // pred_fallthru
        _
    $region12: #{tpu_custom_call.1} parent=5 // pred_fallthru
      _
    %p348 = scmp.lt.s32.totalorder %s17, 4
    // Predicated region
    $region45: #{tpu_custom_call.1} parent=5 // pred_check
      %p349 = pneg %p348
    $region46: #{tpu_custom_call.1} parent=5 // pred_check_branch
      %351 = sbr.rel (%p349) target = $region48
    $region47: #{tpu_custom_call.1} parent=5 // pred_region
      // Predicated region
      $region49: #{tpu_custom_call.1} parent=47 // pred_check
        %p352 = pneg %p51
      $region50: #{tpu_custom_call.1} parent=47 // pred_check_branch
        %354 = sbr.rel (%p352) target = $region52
      $region51: #{tpu_custom_call.1} parent=47 // pred_region
        %s355 = smul.u32 16, %s25
        %p356 = scmp.lt.s32.totalorder %s24, 1
        %s357 = scalar_select %p356, %s24, 1
        %p358 = scmp.lt.s32.totalorder %s355, 31
        %s359 = scalar_select %p358, %s355, 31
        %s360 = smul.addr %s357, 32
        %s361 = sadd.s32 %s359, %s360
        %s362 = smul.addr %s361, 4
        %s363 = scalar_lea.vmem %s0, %s362
        %s364 = smul.u32 16, %s25
      $region52: #{tpu_custom_call.1} parent=47 // pred_fallthru
        _
      // Predicated region
      $region53: #{tpu_custom_call.1} parent=47 // pred_check
        %p365 = pneg %p79
      $region54: #{tpu_custom_call.1} parent=47 // pred_check_branch
        %367 = sbr.rel (%p365) target = $region56
      $region55: #{tpu_custom_call.1} parent=47 // pred_region
        %p368 = scmp.lt.s32.totalorder %s24, 1
        %s369 = scalar_select %p368, %s24, 1
        %p370 = scmp.lt.s32.totalorder %s25, 1
        %s371 = scalar_select %p370, %s25, 1
        %s372 = smul.addr %s371, 2
        %s373 = smul.addr %s369, 4
        %s374 = sadd.s32 %s372, %s373
        %s375 = smul.addr %s374, 4
        %s376 = scalar_lea.vmem %s1, %s375
      $region56: #{tpu_custom_call.1} parent=47 // pred_fallthru
        _
      // Predicated region
      $region57: #{tpu_custom_call.1} parent=47 // pred_check
        %p377 = pneg %p107
      $region58: #{tpu_custom_call.1} parent=47 // pred_check_branch
        %379 = sbr.rel (%p377) target = $region60
      $region59: #{tpu_custom_call.1} parent=47 // pred_region
        %p380 = scmp.lt.s32.totalorder %s24, 1
        %s381 = scalar_select %p380, %s24, 1
        %p382 = scmp.lt.s32.totalorder %s25, 1
        %s383 = scalar_select %p382, %s25, 1
        %s384 = smul.addr %s383, 2
        %s385 = smul.addr %s381, 4
        %s386 = sadd.s32 %s384, %s385
        %s387 = smul.addr %s386, 4
        %s388 = scalar_lea.vmem %s2, %s387
      $region60: #{tpu_custom_call.1} parent=47 // pred_fallthru
        _
    $region48: #{tpu_custom_call.1} parent=5 // pred_fallthru
      _
    %p389 = scmp.le.s32.totalorder 1, %s17
    %p390 = scmp.lt.s32.totalorder %s17, 5
    %p391 = pnand %p389, %p390
    %p392 = pneg %p391
    // Predicated region
    $region61: #{tpu_custom_call.1} parent=5 // pred_check
      _
    $region62: #{tpu_custom_call.1} parent=5 // pred_check_branch
      %394 = sbr.rel (%p391) target = $region64
    $region63: #{tpu_custom_call.1} parent=5 // pred_region
      %s395 = ssub.s32 %s17, 1
      %s396 = smul.u32 16, %s27
      %p397 = scmp.lt.s32.totalorder %s26, 1
      %s398 = scalar_select %p397, %s26, 1
      %p399 = scmp.lt.s32.totalorder %s396, 31
      %s400 = scalar_select %p399, %s396, 31
      %s401 = smul.addr %s398, 32
      %s402 = sadd.s32 %s400, %s401
      %s403 = smul.addr %s402, 4
      %s404 = scalar_lea.vmem %s0, %s403
      %p405 = pneg %p57
      %p406 = pneg %p54
      %p407 = scmp.lt.s32.totalorder %s26, 1
      %s408 = scalar_select %p407, %s26, 1
      %p409 = scmp.lt.s32.totalorder %s27, 1
      %s410 = scalar_select %p409, %s27, 1
      %s411 = smul.addr %s410, 2
      %s412 = smul.addr %s408, 4
      %s413 = sadd.s32 %s411, %s412
      %s414 = smul.addr %s413, 4
      %s415 = scalar_lea.vmem %s1, %s414
      %p416 = pneg %p85
      %p417 = pneg %p82
      %p418 = scmp.lt.s32.totalorder %s26, 1
      %s419 = scalar_select %p418, %s26, 1
      %p420 = scmp.lt.s32.totalorder %s27, 1
      %s421 = scalar_select %p420, %s27, 1
      %s422 = smul.addr %s421, 2
      %s423 = smul.addr %s419, 4
      %s424 = sadd.s32 %s422, %s423
      %s425 = smul.addr %s424, 4
      %s426 = scalar_lea.vmem %s2, %s425
      %p427 = pneg %p113
      %p428 = pneg %p110
      %p429 = pneg %p134
      %p430 = pneg %p131
      %p431 = pneg %p155
      %p432 = pneg %p152
      %p433 = pneg %p176
      %p434 = pneg %p173
      %p435 = pneg %p197
      %p436 = pneg %p194
      %p437 = pneg %p218
      %p438 = pneg %p215
      %p439 = pneg %p239
      %p440 = pneg %p236
      %p441 = pneg %p260
      %p442 = pneg %p257
      %p443 = pneg %p281
      %p444 = pneg %p278
      %p445 = pneg %p309
      %p446 = pneg %p306
      %s447 = smul.u32 16, %s27
      %p448 = scmp.lt.s32.totalorder %s26, 1
      %s449 = scalar_select %p448, %s26, 1
      %p450 = scmp.lt.s32.totalorder %s447, 31
      %s451 = scalar_select %p450, %s447, 31
      %s452 = smul.addr %s449, 32
      %s453 = sadd.s32 %s451, %s452
      %s454 = smul.addr %s453, 8
      %s455 = scalar_lea.vmem %s11, %s454
      %s456 = smul.u32 16, %s27
      %p457 = scmp.lt.s32.totalorder %s26, 1
      %s458 = scalar_select %p457, %s26, 1
      %p459 = scmp.lt.s32.totalorder %s456, 31
      %s460 = scalar_select %p459, %s456, 31
      %s461 = smul.addr %s458, 32
      %s462 = sadd.s32 %s460, %s461
      %s463 = smul.addr %s462, 4
      %s464 = scalar_lea.vmem %s0, %s463
      %s465 = smul.u32 16, %s27
      %p466 = scmp.lt.s32.totalorder %s26, 1
      %s467 = scalar_select %p466, %s26, 1
      %p468 = scmp.lt.s32.totalorder %s27, 1
      %s469 = scalar_select %p468, %s27, 1
      %s470 = smul.addr %s469, 2
      %s471 = smul.addr %s467, 4
      %s472 = sadd.s32 %s470, %s471
      %s473 = smul.addr %s472, 4
      %s474 = scalar_lea.vmem %s1, %s473
      %p475 = scmp.lt.s32.totalorder %s26, 1
      %s476 = scalar_select %p475, %s26, 1
      %p477 = scmp.lt.s32.totalorder %s27, 1
      %s478 = scalar_select %p477, %s27, 1
      %s479 = smul.addr %s478, 2
      %s480 = smul.addr %s476, 4
      %s481 = sadd.s32 %s479, %s480
      %s482 = smul.addr %s481, 4
      %s483 = scalar_lea.vmem %s2, %s482
      %s484 = smul.u32 16, %s27
      %p485 = scmp.lt.s32.totalorder %s26, 1
      %s486 = scalar_select %p485, %s26, 1
      %p487 = scmp.lt.s32.totalorder %s484, 31
      %s488 = scalar_select %p487, %s484, 31
      %s489 = smul.addr %s486, 32
      %s490 = sadd.s32 %s488, %s489
      %s491 = smul.addr %s490, 8
      %s492 = scalar_lea.vmem %s11, %s491
      %s493 = smul.u32 16, %s27
      %v495 = vld [vmem:[%s464] sm:$0xf]
      %v496 = vld [vmem:[%s464 + $0x4] sm:$0xf]
      %v497 = vld [vmem:[%s464 + $0x8] sm:$0xf]
      %v498 = vld [vmem:[%s464 + $0xc] sm:$0xf]
      %v499 = vld [vmem:[%s464 + $0x10] sm:$0xf]
      %v500 = vld [vmem:[%s464 + $0x14] sm:$0xf]
      %v501 = vld [vmem:[%s464 + $0x18] sm:$0xf]
      %v502 = vld [vmem:[%s464 + $0x1c] sm:$0xf]
      %v503 = vld [vmem:[%s464 + $0x20] sm:$0xf]
      %v504 = vld [vmem:[%s464 + $0x24] sm:$0xf]
      %v505 = vld [vmem:[%s464 + $0x28] sm:$0xf]
      %v506 = vld [vmem:[%s464 + $0x2c] sm:$0xf]
      %v507 = vld [vmem:[%s464 + $0x30] sm:$0xf]
      %v508 = vld [vmem:[%s464 + $0x34] sm:$0xf]
      %v509 = vld [vmem:[%s464 + $0x38] sm:$0xf]
      %v510 = vld [vmem:[%s464 + $0x3c] sm:$0xf]
      %v511 = vld [vmem:[%s474] sm:$0xf]
      %v512 = vld [vmem:[%s474 + $0x4] sm:$0xf]
      %v513 = vld [vmem:[%s483] sm:$0xf]
      %v514 = vld [vmem:[%s483 + $0x4] sm:$0xf]
      %v517 = vunpack.c.l.b16 %v511
      %v518 = vunpack.c.l.b16 %v512
      %v519 = vpack.c.b16 %v518, %v517
      %v536 = vunpack.c.l.b16 %v495
      %v537 = vunpack.c.l.b16 %v496
      %v538 = vunpack.c.l.b16 %v497
      %v539 = vunpack.c.l.b16 %v498
      %v540 = vunpack.c.l.b16 %v499
      %v541 = vunpack.c.l.b16 %v500
      %v542 = vunpack.c.l.b16 %v501
      %v543 = vunpack.c.l.b16 %v502
      %v544 = vunpack.c.l.b16 %v503
      %v545 = vunpack.c.l.b16 %v504
      %v546 = vunpack.c.l.b16 %v505
      %v547 = vunpack.c.l.b16 %v506
      %v548 = vunpack.c.l.b16 %v507
      %v549 = vunpack.c.l.b16 %v508
      %v550 = vunpack.c.l.b16 %v509
      %v551 = vunpack.c.l.b16 %v510
      %v552 = vpack.c.b16 %v537, %v536
      %v553 = vpack.c.b16 %v539, %v538
      %v554 = vpack.c.b16 %v541, %v540
      %v555 = vpack.c.b16 %v543, %v542
      %v556 = vpack.c.b16 %v545, %v544
      %v557 = vpack.c.b16 %v547, %v546
      %v558 = vpack.c.b16 %v549, %v548
      %v559 = vpack.c.b16 %v551, %v550
      %v562 = vunpack.c.l.b16 %v513
      %v563 = vunpack.c.l.b16 %v514
      %v564 = vpack.c.b16 %v563, %v562
      %v565 = vld [vmem:[%s3] sm:$0xf]
      %vm566 = vcmask 64512
      %v568 = vsel %vm566, %v519, 0
      %v571 = vsel %vm566, %v552, 0
      %v574 = vsel %vm566, %v553, 0
      %v577 = vsel %vm566, %v554, 0
      %v580 = vsel %vm566, %v555, 0
      %v583 = vsel %vm566, %v556, 0
      %v586 = vsel %vm566, %v557, 0
      %v589 = vsel %vm566, %v558, 0
      %v592 = vsel %vm566, %v559, 0
      %v595 = vsel %vm566, %v564, 0
      %vm597 = vcmask 1043456
      %v599 = vsel %vm597, %v565, 0
      %601 = vmatprep.subr.bf16.mxu0 0
      %602 = vmatpush1.bf16.msra.mxu0 %v599
      %603 = vmatprep.subr.bf16.mxu0 0
      %604 = vmatpush1.bf16.msra.mxu0 0
      %605 = vmatprep.subr.bf16.mxu0 0
      %606 = vmatpush1.bf16.msra.mxu0 0
      %607 = vmatprep.subr.bf16.mxu0 0
      %608 = vmatpush1.bf16.msra.mxu0 0
      %609 = vmatprep.subr.bf16.mxu0 0
      %610 = vmatpush1.bf16.msra.mxu0 0
      %611 = vmatprep.subr.bf16.mxu0 0
      %612 = vmatpush1.bf16.msra.mxu0 0
      %613 = vmatprep.subr.bf16.mxu0 0
      %614 = vmatpush1.bf16.msra.mxu0 0
      %615 = vmatprep.subr.bf16.mxu0 0
      %616 = vmatpush1.bf16.msra.mxu0 0
      %617 = vmatprep.subr.bf16.mxu0 0
      %618 = vmatpush1.bf16.msra.mxu0 0
      %619 = vmatprep.subr.bf16.mxu0 0
      %620 = vmatpush1.bf16.msra.mxu0 0
      %621 = vmatprep.subr.bf16.mxu0 0
      %622 = vmatpush1.bf16.msra.mxu0 0
      %623 = vmatprep.subr.bf16.mxu0 0
      %624 = vmatpush1.bf16.msra.mxu0 0
      %625 = vmatprep.subr.bf16.mxu0 0
      %626 = vmatpush1.bf16.msra.mxu0 0
      %627 = vmatprep.subr.bf16.mxu0 0
      %628 = vmatpush1.bf16.msra.mxu0 0
      %629 = vmatprep.subr.bf16.mxu0 0
      %630 = vmatpush1.bf16.msra.mxu0 0
      %631 = vmatprep.subr.bf16.mxu0 0
      %632 = vmatpush1.bf16.msra.mxu0 0
      %633 = vmatprep.mubr.bf16.mxu0 0
      %634 = vmatmul.mubr.bf16.gmra.mrb[0].mxu0 %v568
      %v635 = vpop.f32.mrb[0].mxu0
      %v636 = vadd.f32 0.0, %v635
      %v637 = vpop.f32.mrb[0].mxu0
      %v638 = vpop.f32.mrb[0].mxu0
      %v639 = vadd.f32 0.0, %v638
      %v640 = vpop.f32.mrb[0].mxu0
      %641 = vmatprep.mubr.bf16.mxu0 0
      %642 = vmatmul.mubr.bf16.gmra.mrb[0].mxu0 %v571
      %v643 = vpop.f32.mrb[0].mxu0
      %v644 = vadd.f32 0.0, %v643
      %v645 = vpop.f32.mrb[0].mxu0
      %v646 = vpop.f32.mrb[0].mxu0
      %v647 = vadd.f32 0.0, %v646
      %v648 = vpop.f32.mrb[0].mxu0
      %649 = vmatprep.mubr.bf16.mxu0 0
      %650 = vmatmul.mubr.bf16.gmra.mrb[0].mxu0 %v574
      %v651 = vpop.f32.mrb[0].mxu0
      %v652 = vadd.f32 0.0, %v651
      %v653 = vpop.f32.mrb[0].mxu0
      %v654 = vpop.f32.mrb[0].mxu0
      %v655 = vadd.f32 0.0, %v654
      %v656 = vpop.f32.mrb[0].mxu0
      %657 = vmatprep.mubr.bf16.mxu0 0
      %658 = vmatmul.mubr.bf16.gmra.mrb[0].mxu0 %v577
      %v659 = vpop.f32.mrb[0].mxu0
      %v660 = vadd.f32 0.0, %v659
      %v661 = vpop.f32.mrb[0].mxu0
      %v662 = vpop.f32.mrb[0].mxu0
      %v663 = vadd.f32 0.0, %v662
      %v664 = vpop.f32.mrb[0].mxu0
      %665 = vmatprep.mubr.bf16.mxu0 0
      %666 = vmatmul.mubr.bf16.gmra.mrb[0].mxu0 %v580
      %v667 = vpop.f32.mrb[0].mxu0
      %v668 = vadd.f32 0.0, %v667
      %v669 = vpop.f32.mrb[0].mxu0
      %v670 = vpop.f32.mrb[0].mxu0
      %v671 = vadd.f32 0.0, %v670
      %v672 = vpop.f32.mrb[0].mxu0
      %673 = vmatprep.mubr.bf16.mxu0 0
      %674 = vmatmul.mubr.bf16.gmra.mrb[0].mxu0 %v583
      %v675 = vpop.f32.mrb[0].mxu0
      %v676 = vadd.f32 0.0, %v675
      %v677 = vpop.f32.mrb[0].mxu0
      %v678 = vpop.f32.mrb[0].mxu0
      %v679 = vadd.f32 0.0, %v678
      %v680 = vpop.f32.mrb[0].mxu0
      %681 = vmatprep.mubr.bf16.mxu0 0
      %682 = vmatmul.mubr.bf16.gmra.mrb[0].mxu0 %v586
      %v683 = vpop.f32.mrb[0].mxu0
      %v684 = vadd.f32 0.0, %v683
      %v685 = vpop.f32.mrb[0].mxu0
      %v686 = vpop.f32.mrb[0].mxu0
      %v687 = vadd.f32 0.0, %v686
      %v688 = vpop.f32.mrb[0].mxu0
      %689 = vmatprep.mubr.bf16.mxu0 0
      %690 = vmatmul.mubr.bf16.gmra.mrb[0].mxu0 %v589
      %v691 = vpop.f32.mrb[0].mxu0
      %v692 = vadd.f32 0.0, %v691
      %v693 = vpop.f32.mrb[0].mxu0
      %v694 = vpop.f32.mrb[0].mxu0
      %v695 = vadd.f32 0.0, %v694
      %v696 = vpop.f32.mrb[0].mxu0
      %697 = vmatprep.mubr.bf16.mxu0 0
      %698 = vmatmul.mubr.bf16.gmra.mrb[0].mxu0 %v592
      %v699 = vpop.f32.mrb[0].mxu0
      %v700 = vadd.f32 0.0, %v699
      %v701 = vpop.f32.mrb[0].mxu0
      %v702 = vpop.f32.mrb[0].mxu0
      %v703 = vadd.f32 0.0, %v702
      %v704 = vpop.f32.mrb[0].mxu0
      %705 = vmatprep.mubr.bf16.mxu0 0
      %706 = vmatmul.mubr.bf16.gmra.mrb[0].mxu0 %v595
      %v707 = vpop.f32.mrb[0].mxu0
      %v708 = vadd.f32 0.0, %v707
      %v709 = vpop.f32.mrb[0].mxu0
      %v710 = vpop.f32.mrb[0].mxu0
      %v711 = vadd.f32 0.0, %v710
      %v712 = vpop.f32.mrb[0].mxu0
      %713 = vdwg.mxu0
      %v714 = vld [vmem:[%s4] sm:$0x1]
      %v716 = vlaneseq
      %v717 = vshrl.u32 %v716, 7
      %v718 = vsub.s32 0, %v717
      %v719 = vrot.slane %v714, %v718
      %v721 = vmul.f32 %v636, %v719
      %v722 = vmul.f32 %v639, %v719
      %v723 = vmul.f32 %v644, %v719
      %v724 = vmul.f32 %v647, %v719
      %v725 = vmul.f32 %v652, %v719
      %v726 = vmul.f32 %v655, %v719
      %v727 = vmul.f32 %v660, %v719
      %v728 = vmul.f32 %v663, %v719
      %v729 = vmul.f32 %v668, %v719
      %v730 = vmul.f32 %v671, %v719
      %v731 = vmul.f32 %v676, %v719
      %v732 = vmul.f32 %v679, %v719
      %v733 = vmul.f32 %v684, %v719
      %v734 = vmul.f32 %v687, %v719
      %v735 = vmul.f32 %v692, %v719
      %v736 = vmul.f32 %v695, %v719
      %v737 = vmul.f32 %v700, %v719
      %v738 = vmul.f32 %v703, %v719
      %v739 = vmul.f32 %v708, %v719
      %v740 = vmul.f32 %v711, %v719
      %v741 = vld [vmem:[%s5] sm:$0x1]
      %v743 = vlaneseq
      %v744 = vshrl.u32 %v743, 7
      %v745 = vsub.s32 0, %v744
      %v746 = vrot.slane %v741, %v745
      %v748 = vadd.f32 %v721, %v746
      %v749 = vadd.f32 %v722, %v746
      %v750 = vadd.f32 %v723, %v746
      %v751 = vadd.f32 %v724, %v746
      %v752 = vadd.f32 %v725, %v746
      %v753 = vadd.f32 %v726, %v746
      %v754 = vadd.f32 %v727, %v746
      %v755 = vadd.f32 %v728, %v746
      %v756 = vadd.f32 %v729, %v746
      %v757 = vadd.f32 %v730, %v746
      %v758 = vadd.f32 %v731, %v746
      %v759 = vadd.f32 %v732, %v746
      %v760 = vadd.f32 %v733, %v746
      %v761 = vadd.f32 %v734, %v746
      %v762 = vadd.f32 %v735, %v746
      %v763 = vadd.f32 %v736, %v746
      %v764 = vadd.f32 %v737, %v746
      %v765 = vadd.f32 %v738, %v746
      %v766 = vadd.f32 %v739, %v746
      %v767 = vadd.f32 %v740, %v746
      %v768 = vmax.f32 %v748, 0.0
      %v769 = vmax.f32 %v749, 0.0
      %v770 = vmax.f32 %v750, 0.0
      %v771 = vmax.f32 %v751, 0.0
      %v772 = vmax.f32 %v752, 0.0
      %v773 = vmax.f32 %v753, 0.0
      %v774 = vmax.f32 %v754, 0.0
      %v775 = vmax.f32 %v755, 0.0
      %v776 = vmax.f32 %v756, 0.0
      %v777 = vmax.f32 %v757, 0.0
      %v778 = vmax.f32 %v758, 0.0
      %v779 = vmax.f32 %v759, 0.0
      %v780 = vmax.f32 %v760, 0.0
      %v781 = vmax.f32 %v761, 0.0
      %v782 = vmax.f32 %v762, 0.0
      %v783 = vmax.f32 %v763, 0.0
      %v784 = vmax.f32 %v764, 0.0
      %v785 = vmax.f32 %v765, 0.0
      %v786 = vmax.f32 %v766, 0.0
      %v787 = vmax.f32 %v767, 0.0
      %v788 = vmin.f32 %v768, 6.0
      %v789 = vmin.f32 %v769, 6.0
      %v790 = vmin.f32 %v770, 6.0
      %v791 = vmin.f32 %v771, 6.0
      %v792 = vmin.f32 %v772, 6.0
      %v793 = vmin.f32 %v773, 6.0
      %v794 = vmin.f32 %v774, 6.0
      %v795 = vmin.f32 %v775, 6.0
      %v796 = vmin.f32 %v776, 6.0
      %v797 = vmin.f32 %v777, 6.0
      %v798 = vmin.f32 %v778, 6.0
      %v799 = vmin.f32 %v779, 6.0
      %v800 = vmin.f32 %v780, 6.0
      %v801 = vmin.f32 %v781, 6.0
      %v802 = vmin.f32 %v782, 6.0
      %v803 = vmin.f32 %v783, 6.0
      %v804 = vmin.f32 %v784, 6.0
      %v805 = vmin.f32 %v785, 6.0
      %v806 = vmin.f32 %v786, 6.0
      %v807 = vmin.f32 %v787, 6.0
      %v808 = vlaneseq
      %v809 = vshrl.u32 %v808, 7
      %v810 = vadd.s32 %v809, 8
      %v811 = vadd.s32 %v809, 16
      %v812 = vadd.s32 %v809, 24
      %v813 = vadd.s32 %v809, 32
      %v814 = vadd.s32 %v809, 40
      %v815 = vadd.s32 %v809, 48
      %v816 = vadd.s32 %v809, 56
      %v817 = vadd.s32 %v809, 64
      %v818 = vadd.s32 %v809, 72
      %v819 = vadd.s32 %v809, 80
      %v820 = vadd.s32 %v809, 88
      %v821 = vadd.s32 %v809, 96
      %v822 = vadd.s32 %v809, 104
      %v823 = vadd.s32 %v809, 112
      %v824 = vadd.s32 %v809, 120
      %v825 = vadd.s32 %v809, 128
      %v826 = vadd.s32 %v809, 136
      %v827 = vadd.s32 %v809, 144
      %v828 = vadd.s32 %v809, 152
      %vm829 = vcmp.lt.s32.totalorder %v809, 16
      %vm830 = vcmp.lt.s32.totalorder %v810, 16
      %vm831 = vcmp.lt.s32.totalorder %v811, 16
      %vm832 = vcmp.lt.s32.totalorder %v812, 16
      %vm833 = vcmp.lt.s32.totalorder %v813, 16
      %vm834 = vcmp.lt.s32.totalorder %v814, 16
      %vm835 = vcmp.lt.s32.totalorder %v815, 16
      %vm836 = vcmp.lt.s32.totalorder %v816, 16
      %vm837 = vcmp.lt.s32.totalorder %v817, 16
      %vm838 = vcmp.lt.s32.totalorder %v818, 16
      %vm839 = vcmp.lt.s32.totalorder %v819, 16
      %vm840 = vcmp.lt.s32.totalorder %v820, 16
      %vm841 = vcmp.lt.s32.totalorder %v821, 16
      %vm842 = vcmp.lt.s32.totalorder %v822, 16
      %vm843 = vcmp.lt.s32.totalorder %v823, 16
      %vm844 = vcmp.lt.s32.totalorder %v824, 16
      %vm845 = vcmp.lt.s32.totalorder %v825, 16
      %vm846 = vcmp.lt.s32.totalorder %v826, 16
      %vm847 = vcmp.lt.s32.totalorder %v827, 16
      %vm848 = vcmp.lt.s32.totalorder %v828, 16
      %p849 = scmp.eq.s32.totalorder %s27, 0
      %s850 = scalar_select %p849, 1, 0
      %v851 = vstv %s850
      %vm852 = vcmp.eq.s32.totalorder %v851, 1
      %vm853 = vmand %vm829, %vm852
      %vm854 = vmand %vm830, %vm852
      %vm855 = vmand %vm831, %vm852
      %vm856 = vmand %vm832, %vm852
      %vm857 = vmand %vm833, %vm852
      %vm858 = vmand %vm834, %vm852
      %vm859 = vmand %vm835, %vm852
      %vm860 = vmand %vm836, %vm852
      %vm861 = vmand %vm837, %vm852
      %vm862 = vmand %vm838, %vm852
      %vm863 = vmand %vm839, %vm852
      %vm864 = vmand %vm840, %vm852
      %vm865 = vmand %vm841, %vm852
      %vm866 = vmand %vm842, %vm852
      %vm867 = vmand %vm843, %vm852
      %vm868 = vmand %vm844, %vm852
      %vm869 = vmand %vm845, %vm852
      %vm870 = vmand %vm846, %vm852
      %vm871 = vmand %vm847, %vm852
      %vm872 = vmand %vm848, %vm852
      %vm873 = vcmp.ge.s32.totalorder %v809, 144
      %vm874 = vcmp.ge.s32.totalorder %v810, 144
      %vm875 = vcmp.ge.s32.totalorder %v811, 144
      %vm876 = vcmp.ge.s32.totalorder %v812, 144
      %vm877 = vcmp.ge.s32.totalorder %v813, 144
      %vm878 = vcmp.ge.s32.totalorder %v814, 144
      %vm879 = vcmp.ge.s32.totalorder %v815, 144
      %vm880 = vcmp.ge.s32.totalorder %v816, 144
      %vm881 = vcmp.ge.s32.totalorder %v817, 144
      %vm882 = vcmp.ge.s32.totalorder %v818, 144
      %vm883 = vcmp.ge.s32.totalorder %v819, 144
      %vm884 = vcmp.ge.s32.totalorder %v820, 144
      %vm885 = vcmp.ge.s32.totalorder %v821, 144
      %vm886 = vcmp.ge.s32.totalorder %v822, 144
      %vm887 = vcmp.ge.s32.totalorder %v823, 144
      %vm888 = vcmp.ge.s32.totalorder %v824, 144
      %vm889 = vcmp.ge.s32.totalorder %v825, 144
      %vm890 = vcmp.ge.s32.totalorder %v826, 144
      %vm891 = vcmp.ge.s32.totalorder %v827, 144
      %vm892 = vcmp.ge.s32.totalorder %v828, 144
      %p893 = scmp.eq.s32.totalorder %s27, 1
      %s894 = scalar_select %p893, 1, 0
      %v895 = vstv %s894
      %vm896 = vcmp.eq.s32.totalorder %v895, 1
      %vm897 = vmand %vm873, %vm896
      %vm898 = vmand %vm874, %vm896
      %vm899 = vmand %vm875, %vm896
      %vm900 = vmand %vm876, %vm896
      %vm901 = vmand %vm877, %vm896
      %vm902 = vmand %vm878, %vm896
      %vm903 = vmand %vm879, %vm896
      %vm904 = vmand %vm880, %vm896
      %vm905 = vmand %vm881, %vm896
      %vm906 = vmand %vm882, %vm896
      %vm907 = vmand %vm883, %vm896
      %vm908 = vmand %vm884, %vm896
      %vm909 = vmand %vm885, %vm896
      %vm910 = vmand %vm886, %vm896
      %vm911 = vmand %vm887, %vm896
      %vm912 = vmand %vm888, %vm896
      %vm913 = vmand %vm889, %vm896
      %vm914 = vmand %vm890, %vm896
      %vm915 = vmand %vm891, %vm896
      %vm916 = vmand %vm892, %vm896
      %vm917 = vmor %vm853, %vm897
      %vm918 = vmor %vm854, %vm898
      %vm919 = vmor %vm855, %vm899
      %vm920 = vmor %vm856, %vm900
      %vm921 = vmor %vm857, %vm901
      %vm922 = vmor %vm858, %vm902
      %vm923 = vmor %vm859, %vm903
      %vm924 = vmor %vm860, %vm904
      %vm925 = vmor %vm861, %vm905
      %vm926 = vmor %vm862, %vm906
      %vm927 = vmor %vm863, %vm907
      %vm928 = vmor %vm864, %vm908
      %vm929 = vmor %vm865, %vm909
      %vm930 = vmor %vm866, %vm910
      %vm931 = vmor %vm867, %vm911
      %vm932 = vmor %vm868, %vm912
      %vm933 = vmor %vm869, %vm913
      %vm934 = vmor %vm870, %vm914
      %vm935 = vmor %vm871, %vm915
      %vm936 = vmor %vm872, %vm916
      %v937 = vsel %vm917, 1, 0
      %v938 = vsel %vm918, 1, 0
      %v939 = vsel %vm919, 1, 0
      %v940 = vsel %vm920, 1, 0
      %v941 = vsel %vm921, 1, 0
      %v942 = vsel %vm922, 1, 0
      %v943 = vsel %vm923, 1, 0
      %v944 = vsel %vm924, 1, 0
      %v945 = vsel %vm925, 1, 0
      %v946 = vsel %vm926, 1, 0
      %v947 = vsel %vm927, 1, 0
      %v948 = vsel %vm928, 1, 0
      %v949 = vsel %vm929, 1, 0
      %v950 = vsel %vm930, 1, 0
      %v951 = vsel %vm931, 1, 0
      %v952 = vsel %vm932, 1, 0
      %v953 = vsel %vm933, 1, 0
      %v954 = vsel %vm934, 1, 0
      %v955 = vsel %vm935, 1, 0
      %v956 = vsel %vm936, 1, 0
      %vm957 = vcmp.eq.s32.totalorder %v937, 1
      %vm958 = vcmp.eq.s32.totalorder %v938, 1
      %vm959 = vcmp.eq.s32.totalorder %v939, 1
      %vm960 = vcmp.eq.s32.totalorder %v940, 1
      %vm961 = vcmp.eq.s32.totalorder %v941, 1
      %vm962 = vcmp.eq.s32.totalorder %v942, 1
      %vm963 = vcmp.eq.s32.totalorder %v943, 1
      %vm964 = vcmp.eq.s32.totalorder %v944, 1
      %vm965 = vcmp.eq.s32.totalorder %v945, 1
      %vm966 = vcmp.eq.s32.totalorder %v946, 1
      %vm967 = vcmp.eq.s32.totalorder %v947, 1
      %vm968 = vcmp.eq.s32.totalorder %v948, 1
      %vm969 = vcmp.eq.s32.totalorder %v949, 1
      %vm970 = vcmp.eq.s32.totalorder %v950, 1
      %vm971 = vcmp.eq.s32.totalorder %v951, 1
      %vm972 = vcmp.eq.s32.totalorder %v952, 1
      %vm973 = vcmp.eq.s32.totalorder %v953, 1
      %vm974 = vcmp.eq.s32.totalorder %v954, 1
      %vm975 = vcmp.eq.s32.totalorder %v955, 1
      %vm976 = vcmp.eq.s32.totalorder %v956, 1
      %v977 = vsel %vm957, 0.0, %v788
      %v978 = vsel %vm958, 0.0, %v789
      %v979 = vsel %vm959, 0.0, %v790
      %v980 = vsel %vm960, 0.0, %v791
      %v981 = vsel %vm961, 0.0, %v792
      %v982 = vsel %vm962, 0.0, %v793
      %v983 = vsel %vm963, 0.0, %v794
      %v984 = vsel %vm964, 0.0, %v795
      %v985 = vsel %vm965, 0.0, %v796
      %v986 = vsel %vm966, 0.0, %v797
      %v987 = vsel %vm967, 0.0, %v798
      %v988 = vsel %vm968, 0.0, %v799
      %v989 = vsel %vm969, 0.0, %v800
      %v990 = vsel %vm970, 0.0, %v801
      %v991 = vsel %vm971, 0.0, %v802
      %v992 = vsel %vm972, 0.0, %v803
      %v993 = vsel %vm973, 0.0, %v804
      %v994 = vsel %vm974, 0.0, %v805
      %v995 = vsel %vm975, 0.0, %v806
      %v996 = vsel %vm976, 0.0, %v807
      %vm997 = vcmp.lt.s32.totalorder %v809, 0
      %v998 = vsub.s32 0, %v809
      %v999 = vsel %vm997, %v998, %v809
      %v1000 = vshrl.u32 %v999, 4
      %v1001 = vand.u32 %v999, 15
      %v1002 = vsub.s32 0, %v1001
      %v1003 = vsel %vm997, %v1002, %v1001
      %vm1004 = vcmp.lt.s32.totalorder %v810, 0
      %v1005 = vsub.s32 0, %v810
      %v1006 = vsel %vm1004, %v1005, %v810
      %v1007 = vshrl.u32 %v1006, 4
      %v1008 = vand.u32 %v1006, 15
      %v1009 = vsub.s32 0, %v1008
      %v1010 = vsel %vm1004, %v1009, %v1008
      %vm1011 = vcmp.lt.s32.totalorder %v811, 0
      %v1012 = vsub.s32 0, %v811
      %v1013 = vsel %vm1011, %v1012, %v811
      %v1014 = vshrl.u32 %v1013, 4
      %v1015 = vand.u32 %v1013, 15
      %v1016 = vsub.s32 0, %v1015
      %v1017 = vsel %vm1011, %v1016, %v1015
      %vm1018 = vcmp.lt.s32.totalorder %v812, 0
      %v1019 = vsub.s32 0, %v812
      %v1020 = vsel %vm1018, %v1019, %v812
      %v1021 = vshrl.u32 %v1020, 4
      %v1022 = vand.u32 %v1020, 15
      %v1023 = vsub.s32 0, %v1022
      %v1024 = vsel %vm1018, %v1023, %v1022
      %vm1025 = vcmp.lt.s32.totalorder %v813, 0
      %v1026 = vsub.s32 0, %v813
      %v1027 = vsel %vm1025, %v1026, %v813
      %v1028 = vshrl.u32 %v1027, 4
      %v1029 = vand.u32 %v1027, 15
      %v1030 = vsub.s32 0, %v1029
      %v1031 = vsel %vm1025, %v1030, %v1029
      %vm1032 = vcmp.lt.s32.totalorder %v814, 0
      %v1033 = vsub.s32 0, %v814
      %v1034 = vsel %vm1032, %v1033, %v814
      %v1035 = vshrl.u32 %v1034, 4
      %v1036 = vand.u32 %v1034, 15
      %v1037 = vsub.s32 0, %v1036
      %v1038 = vsel %vm1032, %v1037, %v1036
      %vm1039 = vcmp.lt.s32.totalorder %v815, 0
      %v1040 = vsub.s32 0, %v815
      %v1041 = vsel %vm1039, %v1040, %v815
      %v1042 = vshrl.u32 %v1041, 4
      %v1043 = vand.u32 %v1041, 15
      %v1044 = vsub.s32 0, %v1043
      %v1045 = vsel %vm1039, %v1044, %v1043
      %vm1046 = vcmp.lt.s32.totalorder %v816, 0
      %v1047 = vsub.s32 0, %v816
      %v1048 = vsel %vm1046, %v1047, %v816
      %v1049 = vshrl.u32 %v1048, 4
      %v1050 = vand.u32 %v1048, 15
      %v1051 = vsub.s32 0, %v1050
      %v1052 = vsel %vm1046, %v1051, %v1050
      %vm1053 = vcmp.lt.s32.totalorder %v817, 0
      %v1054 = vsub.s32 0, %v817
      %v1055 = vsel %vm1053, %v1054, %v817
      %v1056 = vshrl.u32 %v1055, 4
      %v1057 = vand.u32 %v1055, 15
      %v1058 = vsub.s32 0, %v1057
      %v1059 = vsel %vm1053, %v1058, %v1057
      %vm1060 = vcmp.lt.s32.totalorder %v818, 0
      %v1061 = vsub.s32 0, %v818
      %v1062 = vsel %vm1060, %v1061, %v818
      %v1063 = vshrl.u32 %v1062, 4
      %v1064 = vand.u32 %v1062, 15
      %v1065 = vsub.s32 0, %v1064
      %v1066 = vsel %vm1060, %v1065, %v1064
      %vm1067 = vcmp.lt.s32.totalorder %v819, 0
      %v1068 = vsub.s32 0, %v819
      %v1069 = vsel %vm1067, %v1068, %v819
      %v1070 = vshrl.u32 %v1069, 4
      %v1071 = vand.u32 %v1069, 15
      %v1072 = vsub.s32 0, %v1071
      %v1073 = vsel %vm1067, %v1072, %v1071
      %vm1074 = vcmp.lt.s32.totalorder %v820, 0
      %v1075 = vsub.s32 0, %v820
      %v1076 = vsel %vm1074, %v1075, %v820
      %v1077 = vshrl.u32 %v1076, 4
      %v1078 = vand.u32 %v1076, 15
      %v1079 = vsub.s32 0, %v1078
      %v1080 = vsel %vm1074, %v1079, %v1078
      %vm1081 = vcmp.lt.s32.totalorder %v821, 0
      %v1082 = vsub.s32 0, %v821
      %v1083 = vsel %vm1081, %v1082, %v821
      %v1084 = vshrl.u32 %v1083, 4
      %v1085 = vand.u32 %v1083, 15
      %v1086 = vsub.s32 0, %v1085
      %v1087 = vsel %vm1081, %v1086, %v1085
      %vm1088 = vcmp.lt.s32.totalorder %v822, 0
      %v1089 = vsub.s32 0, %v822
      %v1090 = vsel %vm1088, %v1089, %v822
      %v1091 = vshrl.u32 %v1090, 4
      %v1092 = vand.u32 %v1090, 15
      %v1093 = vsub.s32 0, %v1092
      %v1094 = vsel %vm1088, %v1093, %v1092
      %vm1095 = vcmp.lt.s32.totalorder %v823, 0
      %v1096 = vsub.s32 0, %v823
      %v1097 = vsel %vm1095, %v1096, %v823
      %v1098 = vshrl.u32 %v1097, 4
      %v1099 = vand.u32 %v1097, 15
      %v1100 = vsub.s32 0, %v1099
      %v1101 = vsel %vm1095, %v1100, %v1099
      %vm1102 = vcmp.lt.s32.totalorder %v824, 0
      %v1103 = vsub.s32 0, %v824
      %v1104 = vsel %vm1102, %v1103, %v824
      %v1105 = vshrl.u32 %v1104, 4
      %v1106 = vand.u32 %v1104, 15
      %v1107 = vsub.s32 0, %v1106
      %v1108 = vsel %vm1102, %v1107, %v1106
      %vm1109 = vcmp.lt.s32.totalorder %v825, 0
      %v1110 = vsub.s32 0, %v825
      %v1111 = vsel %vm1109, %v1110, %v825
      %v1112 = vshrl.u32 %v1111, 4
      %v1113 = vand.u32 %v1111, 15
      %v1114 = vsub.s32 0, %v1113
      %v1115 = vsel %vm1109, %v1114, %v1113
      %vm1116 = vcmp.lt.s32.totalorder %v826, 0
      %v1117 = vsub.s32 0, %v826
      %v1118 = vsel %vm1116, %v1117, %v826
      %v1119 = vshrl.u32 %v1118, 4
      %v1120 = vand.u32 %v1118, 15
      %v1121 = vsub.s32 0, %v1120
      %v1122 = vsel %vm1116, %v1121, %v1120
      %vm1123 = vcmp.lt.s32.totalorder %v827, 0
      %v1124 = vsub.s32 0, %v827
      %v1125 = vsel %vm1123, %v1124, %v827
      %v1126 = vshrl.u32 %v1125, 4
      %v1127 = vand.u32 %v1125, 15
      %v1128 = vsub.s32 0, %v1127
      %v1129 = vsel %vm1123, %v1128, %v1127
      %vm1130 = vcmp.lt.s32.totalorder %v828, 0
      %v1131 = vsub.s32 0, %v828
      %v1132 = vsel %vm1130, %v1131, %v828
      %v1133 = vshrl.u32 %v1132, 4
      %v1134 = vand.u32 %v1132, 15
      %v1135 = vsub.s32 0, %v1134
      %v1136 = vsel %vm1130, %v1135, %v1134
      %vm1137 = vcmp.ne.s32.totalorder %v1003, 0
      %vm1138 = vcmp.ne.s32.totalorder %v1010, 0
      %vm1139 = vcmp.ne.s32.totalorder %v1017, 0
      %vm1140 = vcmp.ne.s32.totalorder %v1024, 0
      %vm1141 = vcmp.ne.s32.totalorder %v1031, 0
      %vm1142 = vcmp.ne.s32.totalorder %v1038, 0
      %vm1143 = vcmp.ne.s32.totalorder %v1045, 0
      %vm1144 = vcmp.ne.s32.totalorder %v1052, 0
      %vm1145 = vcmp.ne.s32.totalorder %v1059, 0
      %vm1146 = vcmp.ne.s32.totalorder %v1066, 0
      %vm1147 = vcmp.ne.s32.totalorder %v1073, 0
      %vm1148 = vcmp.ne.s32.totalorder %v1080, 0
      %vm1149 = vcmp.ne.s32.totalorder %v1087, 0
      %vm1150 = vcmp.ne.s32.totalorder %v1094, 0
      %vm1151 = vcmp.ne.s32.totalorder %v1101, 0
      %vm1152 = vcmp.ne.s32.totalorder %v1108, 0
      %vm1153 = vcmp.ne.s32.totalorder %v1115, 0
      %vm1154 = vcmp.ne.s32.totalorder %v1122, 0
      %vm1155 = vcmp.ne.s32.totalorder %v1129, 0
      %vm1156 = vcmp.ne.s32.totalorder %v1136, 0
      %vm1157 = vcmp.lt.s32.totalorder %v1003, 0
      %vm1158 = vcmp.lt.s32.totalorder %v1010, 0
      %vm1159 = vcmp.lt.s32.totalorder %v1017, 0
      %vm1160 = vcmp.lt.s32.totalorder %v1024, 0
      %vm1161 = vcmp.lt.s32.totalorder %v1031, 0
      %vm1162 = vcmp.lt.s32.totalorder %v1038, 0
      %vm1163 = vcmp.lt.s32.totalorder %v1045, 0
      %vm1164 = vcmp.lt.s32.totalorder %v1052, 0
      %vm1165 = vcmp.lt.s32.totalorder %v1059, 0
      %vm1166 = vcmp.lt.s32.totalorder %v1066, 0
      %vm1167 = vcmp.lt.s32.totalorder %v1073, 0
      %vm1168 = vcmp.lt.s32.totalorder %v1080, 0
      %vm1169 = vcmp.lt.s32.totalorder %v1087, 0
      %vm1170 = vcmp.lt.s32.totalorder %v1094, 0
      %vm1171 = vcmp.lt.s32.totalorder %v1101, 0
      %vm1172 = vcmp.lt.s32.totalorder %v1108, 0
      %vm1173 = vcmp.lt.s32.totalorder %v1115, 0
      %vm1174 = vcmp.lt.s32.totalorder %v1122, 0
      %vm1175 = vcmp.lt.s32.totalorder %v1129, 0
      %vm1176 = vcmp.lt.s32.totalorder %v1136, 0
      %vm1177 = vmand %vm1157, %vm1137
      %vm1178 = vmand %vm1158, %vm1138
      %vm1179 = vmand %vm1159, %vm1139
      %vm1180 = vmand %vm1160, %vm1140
      %vm1181 = vmand %vm1161, %vm1141
      %vm1182 = vmand %vm1162, %vm1142
      %vm1183 = vmand %vm1163, %vm1143
      %vm1184 = vmand %vm1164, %vm1144
      %vm1185 = vmand %vm1165, %vm1145
      %vm1186 = vmand %vm1166, %vm1146
      %vm1187 = vmand %vm1167, %vm1147
      %vm1188 = vmand %vm1168, %vm1148
      %vm1189 = vmand %vm1169, %vm1149
      %vm1190 = vmand %vm1170, %vm1150
      %vm1191 = vmand %vm1171, %vm1151
      %vm1192 = vmand %vm1172, %vm1152
      %vm1193 = vmand %vm1173, %vm1153
      %vm1194 = vmand %vm1174, %vm1154
      %vm1195 = vmand %vm1175, %vm1155
      %vm1196 = vmand %vm1176, %vm1156
      %v1197 = vadd.s32 %v1003, 16
      %v1198 = vadd.s32 %v1010, 16
      %v1199 = vadd.s32 %v1017, 16
      %v1200 = vadd.s32 %v1024, 16
      %v1201 = vadd.s32 %v1031, 16
      %v1202 = vadd.s32 %v1038, 16
      %v1203 = vadd.s32 %v1045, 16
      %v1204 = vadd.s32 %v1052, 16
      %v1205 = vadd.s32 %v1059, 16
      %v1206 = vadd.s32 %v1066, 16
      %v1207 = vadd.s32 %v1073, 16
      %v1208 = vadd.s32 %v1080, 16
      %v1209 = vadd.s32 %v1087, 16
      %v1210 = vadd.s32 %v1094, 16
      %v1211 = vadd.s32 %v1101, 16
      %v1212 = vadd.s32 %v1108, 16
      %v1213 = vadd.s32 %v1115, 16
      %v1214 = vadd.s32 %v1122, 16
      %v1215 = vadd.s32 %v1129, 16
      %v1216 = vadd.s32 %v1136, 16
      %v1217 = vsel %vm1177, %v1197, %v1003
      %v1218 = vsel %vm1178, %v1198, %v1010
      %v1219 = vsel %vm1179, %v1199, %v1017
      %v1220 = vsel %vm1180, %v1200, %v1024
      %v1221 = vsel %vm1181, %v1201, %v1031
      %v1222 = vsel %vm1182, %v1202, %v1038
      %v1223 = vsel %vm1183, %v1203, %v1045
      %v1224 = vsel %vm1184, %v1204, %v1052
      %v1225 = vsel %vm1185, %v1205, %v1059
      %v1226 = vsel %vm1186, %v1206, %v1066
      %v1227 = vsel %vm1187, %v1207, %v1073
      %v1228 = vsel %vm1188, %v1208, %v1080
      %v1229 = vsel %vm1189, %v1209, %v1087
      %v1230 = vsel %vm1190, %v1210, %v1094
      %v1231 = vsel %vm1191, %v1211, %v1101
      %v1232 = vsel %vm1192, %v1212, %v1108
      %v1233 = vsel %vm1193, %v1213, %v1115
      %v1234 = vsel %vm1194, %v1214, %v1122
      %v1235 = vsel %vm1195, %v1215, %v1129
      %v1236 = vsel %vm1196, %v1216, %v1136
      %vm1237 = vcmp.gt.s32.totalorder %v1217, 0
      %vm1238 = vcmp.gt.s32.totalorder %v1218, 0
      %vm1239 = vcmp.gt.s32.totalorder %v1219, 0
      %vm1240 = vcmp.gt.s32.totalorder %v1220, 0
      %vm1241 = vcmp.gt.s32.totalorder %v1221, 0
      %vm1242 = vcmp.gt.s32.totalorder %v1222, 0
      %vm1243 = vcmp.gt.s32.totalorder %v1223, 0
      %vm1244 = vcmp.gt.s32.totalorder %v1224, 0
      %vm1245 = vcmp.gt.s32.totalorder %v1225, 0
      %vm1246 = vcmp.gt.s32.totalorder %v1226, 0
      %vm1247 = vcmp.gt.s32.totalorder %v1227, 0
      %vm1248 = vcmp.gt.s32.totalorder %v1228, 0
      %vm1249 = vcmp.gt.s32.totalorder %v1229, 0
      %vm1250 = vcmp.gt.s32.totalorder %v1230, 0
      %vm1251 = vcmp.gt.s32.totalorder %v1231, 0
      %vm1252 = vcmp.gt.s32.totalorder %v1232, 0
      %vm1253 = vcmp.gt.s32.totalorder %v1233, 0
      %vm1254 = vcmp.gt.s32.totalorder %v1234, 0
      %vm1255 = vcmp.gt.s32.totalorder %v1235, 0
      %vm1256 = vcmp.gt.s32.totalorder %v1236, 0
      %v1257 = vrot.slane %v977, 7
      %v1258 = vrot.slane %v978, 7
      %v1259 = vrot.slane %v979, 7
      %v1260 = vrot.slane %v980, 7
      %v1261 = vrot.slane %v981, 7
      %v1262 = vrot.slane %v982, 7
      %v1263 = vrot.slane %v983, 7
      %v1264 = vrot.slane %v984, 7
      %v1265 = vrot.slane %v985, 7
      %v1266 = vrot.slane %v986, 7
      %v1267 = vrot.slane %v987, 7
      %v1268 = vrot.slane %v988, 7
      %v1269 = vrot.slane %v989, 7
      %v1270 = vrot.slane %v990, 7
      %v1271 = vrot.slane %v991, 7
      %v1272 = vrot.slane %v992, 7
      %v1273 = vrot.slane %v993, 7
      %v1274 = vrot.slane %v994, 7
      %v1275 = vrot.slane %v995, 7
      %v1276 = vrot.slane %v996, 7
      %vm1277 = vcmp.lt.s32.totalorder %v809, 1
      %v1278 = vsel %vm1277, %v1275, %v1276
      %v1279 = vsel %vm1277, %v1274, %v1275
      %v1280 = vsel %vm1277, %v1273, %v1274
      %v1281 = vsel %vm1277, %v1272, %v1273
      %v1282 = vsel %vm1277, %v1271, %v1272
      %v1283 = vsel %vm1277, %v1270, %v1271
      %v1284 = vsel %vm1277, %v1269, %v1270
      %v1285 = vsel %vm1277, %v1268, %v1269
      %v1286 = vsel %vm1277, %v1267, %v1268
      %v1287 = vsel %vm1277, %v1266, %v1267
      %v1288 = vsel %vm1277, %v1265, %v1266
      %v1289 = vsel %vm1277, %v1264, %v1265
      %v1290 = vsel %vm1277, %v1263, %v1264
      %v1291 = vsel %vm1277, %v1262, %v1263
      %v1292 = vsel %vm1277, %v1261, %v1262
      %v1293 = vsel %vm1277, %v1260, %v1261
      %v1294 = vsel %vm1277, %v1259, %v1260
      %v1295 = vsel %vm1277, %v1258, %v1259
      %v1296 = vsel %vm1277, %v1257, %v1258
      %v1297 = vsel %vm1277, %v1276, %v1257
      %v1298 = vsel %vm1237, 1, 0
      %v1299 = vsel %vm1238, 1, 0
      %v1300 = vsel %vm1239, 1, 0
      %v1301 = vsel %vm1240, 1, 0
      %v1302 = vsel %vm1241, 1, 0
      %v1303 = vsel %vm1242, 1, 0
      %v1304 = vsel %vm1243, 1, 0
      %v1305 = vsel %vm1244, 1, 0
      %v1306 = vsel %vm1245, 1, 0
      %v1307 = vsel %vm1246, 1, 0
      %v1308 = vsel %vm1247, 1, 0
      %v1309 = vsel %vm1248, 1, 0
      %v1310 = vsel %vm1249, 1, 0
      %v1311 = vsel %vm1250, 1, 0
      %v1312 = vsel %vm1251, 1, 0
      %v1313 = vsel %vm1252, 1, 0
      %v1314 = vsel %vm1253, 1, 0
      %v1315 = vsel %vm1254, 1, 0
      %v1316 = vsel %vm1255, 1, 0
      %v1317 = vsel %vm1256, 1, 0
      %vm1318 = vcmp.eq.s32.totalorder %v1298, 1
      %vm1319 = vcmp.eq.s32.totalorder %v1299, 1
      %vm1320 = vcmp.eq.s32.totalorder %v1300, 1
      %vm1321 = vcmp.eq.s32.totalorder %v1301, 1
      %vm1322 = vcmp.eq.s32.totalorder %v1302, 1
      %vm1323 = vcmp.eq.s32.totalorder %v1303, 1
      %vm1324 = vcmp.eq.s32.totalorder %v1304, 1
      %vm1325 = vcmp.eq.s32.totalorder %v1305, 1
      %vm1326 = vcmp.eq.s32.totalorder %v1306, 1
      %vm1327 = vcmp.eq.s32.totalorder %v1307, 1
      %vm1328 = vcmp.eq.s32.totalorder %v1308, 1
      %vm1329 = vcmp.eq.s32.totalorder %v1309, 1
      %vm1330 = vcmp.eq.s32.totalorder %v1310, 1
      %vm1331 = vcmp.eq.s32.totalorder %v1311, 1
      %vm1332 = vcmp.eq.s32.totalorder %v1312, 1
      %vm1333 = vcmp.eq.s32.totalorder %v1313, 1
      %vm1334 = vcmp.eq.s32.totalorder %v1314, 1
      %vm1335 = vcmp.eq.s32.totalorder %v1315, 1
      %vm1336 = vcmp.eq.s32.totalorder %v1316, 1
      %vm1337 = vcmp.eq.s32.totalorder %v1317, 1
      %v1338 = vsel %vm1318, %v1297, 0.0
      %v1339 = vsel %vm1319, %v1296, 0.0
      %v1340 = vsel %vm1320, %v1295, 0.0
      %v1341 = vsel %vm1321, %v1294, 0.0
      %v1342 = vsel %vm1322, %v1293, 0.0
      %v1343 = vsel %vm1323, %v1292, 0.0
      %v1344 = vsel %vm1324, %v1291, 0.0
      %v1345 = vsel %vm1325, %v1290, 0.0
      %v1346 = vsel %vm1326, %v1289, 0.0
      %v1347 = vsel %vm1327, %v1288, 0.0
      %v1348 = vsel %vm1328, %v1287, 0.0
      %v1349 = vsel %vm1329, %v1286, 0.0
      %v1350 = vsel %vm1330, %v1285, 0.0
      %v1351 = vsel %vm1331, %v1284, 0.0
      %v1352 = vsel %vm1332, %v1283, 0.0
      %v1353 = vsel %vm1333, %v1282, 0.0
      %v1354 = vsel %vm1334, %v1281, 0.0
      %v1355 = vsel %vm1335, %v1280, 0.0
      %v1356 = vsel %vm1336, %v1279, 0.0
      %v1357 = vsel %vm1337, %v1278, 0.0
      %vm1358 = vcmp.lt.s32.totalorder %v1217, 15
      %vm1359 = vcmp.lt.s32.totalorder %v1218, 15
      %vm1360 = vcmp.lt.s32.totalorder %v1219, 15
      %vm1361 = vcmp.lt.s32.totalorder %v1220, 15
      %vm1362 = vcmp.lt.s32.totalorder %v1221, 15
      %vm1363 = vcmp.lt.s32.totalorder %v1222, 15
      %vm1364 = vcmp.lt.s32.totalorder %v1223, 15
      %vm1365 = vcmp.lt.s32.totalorder %v1224, 15
      %vm1366 = vcmp.lt.s32.totalorder %v1225, 15
      %vm1367 = vcmp.lt.s32.totalorder %v1226, 15
      %vm1368 = vcmp.lt.s32.totalorder %v1227, 15
      %vm1369 = vcmp.lt.s32.totalorder %v1228, 15
      %vm1370 = vcmp.lt.s32.totalorder %v1229, 15
      %vm1371 = vcmp.lt.s32.totalorder %v1230, 15
      %vm1372 = vcmp.lt.s32.totalorder %v1231, 15
      %vm1373 = vcmp.lt.s32.totalorder %v1232, 15
      %vm1374 = vcmp.lt.s32.totalorder %v1233, 15
      %vm1375 = vcmp.lt.s32.totalorder %v1234, 15
      %vm1376 = vcmp.lt.s32.totalorder %v1235, 15
      %vm1377 = vcmp.lt.s32.totalorder %v1236, 15
      %v1378 = vrot.slane %v977, 1
      %v1379 = vrot.slane %v978, 1
      %v1380 = vrot.slane %v979, 1
      %v1381 = vrot.slane %v980, 1
      %v1382 = vrot.slane %v981, 1
      %v1383 = vrot.slane %v982, 1
      %v1384 = vrot.slane %v983, 1
      %v1385 = vrot.slane %v984, 1
      %v1386 = vrot.slane %v985, 1
      %v1387 = vrot.slane %v986, 1
      %v1388 = vrot.slane %v987, 1
      %v1389 = vrot.slane %v988, 1
      %v1390 = vrot.slane %v989, 1
      %v1391 = vrot.slane %v990, 1
      %v1392 = vrot.slane %v991, 1
      %v1393 = vrot.slane %v992, 1
      %v1394 = vrot.slane %v993, 1
      %v1395 = vrot.slane %v994, 1
      %v1396 = vrot.slane %v995, 1
      %v1397 = vrot.slane %v996, 1
      %vm1398 = vcmp.lt.s32.totalorder %v809, 7
      %v1399 = vsel %vm1398, %v1396, %v1397
      %v1400 = vsel %vm1398, %v1395, %v1396
      %v1401 = vsel %vm1398, %v1394, %v1395
      %v1402 = vsel %vm1398, %v1393, %v1394
      %v1403 = vsel %vm1398, %v1392, %v1393
      %v1404 = vsel %vm1398, %v1391, %v1392
      %v1405 = vsel %vm1398, %v1390, %v1391
      %v1406 = vsel %vm1398, %v1389, %v1390
      %v1407 = vsel %vm1398, %v1388, %v1389
      %v1408 = vsel %vm1398, %v1387, %v1388
      %v1409 = vsel %vm1398, %v1386, %v1387
      %v1410 = vsel %vm1398, %v1385, %v1386
      %v1411 = vsel %vm1398, %v1384, %v1385
      %v1412 = vsel %vm1398, %v1383, %v1384
      %v1413 = vsel %vm1398, %v1382, %v1383
      %v1414 = vsel %vm1398, %v1381, %v1382
      %v1415 = vsel %vm1398, %v1380, %v1381
      %v1416 = vsel %vm1398, %v1379, %v1380
      %v1417 = vsel %vm1398, %v1378, %v1379
      %v1418 = vsel %vm1398, %v1397, %v1378
      %v1419 = vsel %vm1358, 1, 0
      %v1420 = vsel %vm1359, 1, 0
      %v1421 = vsel %vm1360, 1, 0
      %v1422 = vsel %vm1361, 1, 0
      %v1423 = vsel %vm1362, 1, 0
      %v1424 = vsel %vm1363, 1, 0
      %v1425 = vsel %vm1364, 1, 0
      %v1426 = vsel %vm1365, 1, 0
      %v1427 = vsel %vm1366, 1, 0
      %v1428 = vsel %vm1367, 1, 0
      %v1429 = vsel %vm1368, 1, 0
      %v1430 = vsel %vm1369, 1, 0
      %v1431 = vsel %vm1370, 1, 0
      %v1432 = vsel %vm1371, 1, 0
      %v1433 = vsel %vm1372, 1, 0
      %v1434 = vsel %vm1373, 1, 0
      %v1435 = vsel %vm1374, 1, 0
      %v1436 = vsel %vm1375, 1, 0
      %v1437 = vsel %vm1376, 1, 0
      %v1438 = vsel %vm1377, 1, 0
      %vm1439 = vcmp.eq.s32.totalorder %v1419, 1
      %vm1440 = vcmp.eq.s32.totalorder %v1420, 1
      %vm1441 = vcmp.eq.s32.totalorder %v1421, 1
      %vm1442 = vcmp.eq.s32.totalorder %v1422, 1
      %vm1443 = vcmp.eq.s32.totalorder %v1423, 1
      %vm1444 = vcmp.eq.s32.totalorder %v1424, 1
      %vm1445 = vcmp.eq.s32.totalorder %v1425, 1
      %vm1446 = vcmp.eq.s32.totalorder %v1426, 1
      %vm1447 = vcmp.eq.s32.totalorder %v1427, 1
      %vm1448 = vcmp.eq.s32.totalorder %v1428, 1
      %vm1449 = vcmp.eq.s32.totalorder %v1429, 1
      %vm1450 = vcmp.eq.s32.totalorder %v1430, 1
      %vm1451 = vcmp.eq.s32.totalorder %v1431, 1
      %vm1452 = vcmp.eq.s32.totalorder %v1432, 1
      %vm1453 = vcmp.eq.s32.totalorder %v1433, 1
      %vm1454 = vcmp.eq.s32.totalorder %v1434, 1
      %vm1455 = vcmp.eq.s32.totalorder %v1435, 1
      %vm1456 = vcmp.eq.s32.totalorder %v1436, 1
      %vm1457 = vcmp.eq.s32.totalorder %v1437, 1
      %vm1458 = vcmp.eq.s32.totalorder %v1438, 1
      %v1459 = vsel %vm1439, %v1417, 0.0
      %v1460 = vsel %vm1440, %v1416, 0.0
      %v1461 = vsel %vm1441, %v1415, 0.0
      %v1462 = vsel %vm1442, %v1414, 0.0
      %v1463 = vsel %vm1443, %v1413, 0.0
      %v1464 = vsel %vm1444, %v1412, 0.0
      %v1465 = vsel %vm1445, %v1411, 0.0
      %v1466 = vsel %vm1446, %v1410, 0.0
      %v1467 = vsel %vm1447, %v1409, 0.0
      %v1468 = vsel %vm1448, %v1408, 0.0
      %v1469 = vsel %vm1449, %v1407, 0.0
      %v1470 = vsel %vm1450, %v1406, 0.0
      %v1471 = vsel %vm1451, %v1405, 0.0
      %v1472 = vsel %vm1452, %v1404, 0.0
      %v1473 = vsel %vm1453, %v1403, 0.0
      %v1474 = vsel %vm1454, %v1402, 0.0
      %v1475 = vsel %vm1455, %v1401, 0.0
      %v1476 = vsel %vm1456, %v1400, 0.0
      %v1477 = vsel %vm1457, %v1399, 0.0
      %v1478 = vsel %vm1458, %v1418, 0.0
      %v1479 = vld [vmem:[%s6] sm:$0xff]
      %v1480 = vld [vmem:[%s6 + $0x8] sm:$0x1]
      %v1481 = vlaneseq
      %v1482 = vshrl.u32 %v1481, 7
      %v1483 = vsub.s32 0, %v1482
      %v1484 = vrot.slane %v1479, %v1483
      %v1485 = vmul.f32 %v1338, %v1484
      %v1486 = vmul.f32 %v1339, %v1484
      %v1487 = vmul.f32 %v1340, %v1484
      %v1488 = vmul.f32 %v1341, %v1484
      %v1489 = vmul.f32 %v1342, %v1484
      %v1490 = vmul.f32 %v1343, %v1484
      %v1491 = vmul.f32 %v1344, %v1484
      %v1492 = vmul.f32 %v1345, %v1484
      %v1493 = vmul.f32 %v1346, %v1484
      %v1494 = vmul.f32 %v1347, %v1484
      %v1495 = vmul.f32 %v1348, %v1484
      %v1496 = vmul.f32 %v1349, %v1484
      %v1497 = vmul.f32 %v1350, %v1484
      %v1498 = vmul.f32 %v1351, %v1484
      %v1499 = vmul.f32 %v1352, %v1484
      %v1500 = vmul.f32 %v1353, %v1484
      %v1501 = vadd.f32 %v1485, 0.0
      %v1502 = vadd.f32 %v1486, 0.0
      %v1503 = vadd.f32 %v1487, 0.0
      %v1504 = vadd.f32 %v1488, 0.0
      %v1505 = vadd.f32 %v1489, 0.0
      %v1506 = vadd.f32 %v1490, 0.0
      %v1507 = vadd.f32 %v1491, 0.0
      %v1508 = vadd.f32 %v1492, 0.0
      %v1509 = vadd.f32 %v1493, 0.0
      %v1510 = vadd.f32 %v1494, 0.0
      %v1511 = vadd.f32 %v1495, 0.0
      %v1512 = vadd.f32 %v1496, 0.0
      %v1513 = vadd.f32 %v1497, 0.0
      %v1514 = vadd.f32 %v1498, 0.0
      %v1515 = vadd.f32 %v1499, 0.0
      %v1516 = vadd.f32 %v1500, 0.0
      %v1517 = vlaneseq
      %v1518 = vshrl.u32 %v1517, 7
      %v1519 = vsub.s32 3, %v1518
      %v1520 = vrot.slane %v1479, %v1519
      %v1521 = vmul.f32 %v1340, %v1520
      %v1522 = vmul.f32 %v1341, %v1520
      %v1523 = vmul.f32 %v1342, %v1520
      %v1524 = vmul.f32 %v1343, %v1520
      %v1525 = vmul.f32 %v1344, %v1520
      %v1526 = vmul.f32 %v1345, %v1520
      %v1527 = vmul.f32 %v1346, %v1520
      %v1528 = vmul.f32 %v1347, %v1520
      %v1529 = vmul.f32 %v1348, %v1520
      %v1530 = vmul.f32 %v1349, %v1520
      %v1531 = vmul.f32 %v1350, %v1520
      %v1532 = vmul.f32 %v1351, %v1520
      %v1533 = vmul.f32 %v1352, %v1520
      %v1534 = vmul.f32 %v1353, %v1520
      %v1535 = vmul.f32 %v1354, %v1520
      %v1536 = vmul.f32 %v1355, %v1520
      %v1537 = vadd.f32 %v1501, %v1521
      %v1538 = vadd.f32 %v1502, %v1522
      %v1539 = vadd.f32 %v1503, %v1523
      %v1540 = vadd.f32 %v1504, %v1524
      %v1541 = vadd.f32 %v1505, %v1525
      %v1542 = vadd.f32 %v1506, %v1526
      %v1543 = vadd.f32 %v1507, %v1527
      %v1544 = vadd.f32 %v1508, %v1528
      %v1545 = vadd.f32 %v1509, %v1529
      %v1546 = vadd.f32 %v1510, %v1530
      %v1547 = vadd.f32 %v1511, %v1531
      %v1548 = vadd.f32 %v1512, %v1532
      %v1549 = vadd.f32 %v1513, %v1533
      %v1550 = vadd.f32 %v1514, %v1534
      %v1551 = vadd.f32 %v1515, %v1535
      %v1552 = vadd.f32 %v1516, %v1536
      %v1553 = vlaneseq
      %v1554 = vshrl.u32 %v1553, 7
      %v1555 = vsub.s32 6, %v1554
      %v1556 = vrot.slane %v1479, %v1555
      %v1557 = vmul.f32 %v1342, %v1556
      %v1558 = vmul.f32 %v1343, %v1556
      %v1559 = vmul.f32 %v1344, %v1556
      %v1560 = vmul.f32 %v1345, %v1556
      %v1561 = vmul.f32 %v1346, %v1556
      %v1562 = vmul.f32 %v1347, %v1556
      %v1563 = vmul.f32 %v1348, %v1556
      %v1564 = vmul.f32 %v1349, %v1556
      %v1565 = vmul.f32 %v1350, %v1556
      %v1566 = vmul.f32 %v1351, %v1556
      %v1567 = vmul.f32 %v1352, %v1556
      %v1568 = vmul.f32 %v1353, %v1556
      %v1569 = vmul.f32 %v1354, %v1556
      %v1570 = vmul.f32 %v1355, %v1556
      %v1571 = vmul.f32 %v1356, %v1556
      %v1572 = vmul.f32 %v1357, %v1556
      %v1573 = vadd.f32 %v1537, %v1557
      %v1574 = vadd.f32 %v1538, %v1558
      %v1575 = vadd.f32 %v1539, %v1559
      %v1576 = vadd.f32 %v1540, %v1560
      %v1577 = vadd.f32 %v1541, %v1561
      %v1578 = vadd.f32 %v1542, %v1562
      %v1579 = vadd.f32 %v1543, %v1563
      %v1580 = vadd.f32 %v1544, %v1564
      %v1581 = vadd.f32 %v1545, %v1565
      %v1582 = vadd.f32 %v1546, %v1566
      %v1583 = vadd.f32 %v1547, %v1567
      %v1584 = vadd.f32 %v1548, %v1568
      %v1585 = vadd.f32 %v1549, %v1569
      %v1586 = vadd.f32 %v1550, %v1570
      %v1587 = vadd.f32 %v1551, %v1571
      %v1588 = vadd.f32 %v1552, %v1572
      %v1589 = vlaneseq
      %v1590 = vshrl.u32 %v1589, 7
      %v1591 = vsub.s32 1, %v1590
      %v1592 = vrot.slane %v1479, %v1591
      %v1593 = vmul.f32 %v977, %v1592
      %v1594 = vmul.f32 %v978, %v1592
      %v1595 = vmul.f32 %v979, %v1592
      %v1596 = vmul.f32 %v980, %v1592
      %v1597 = vmul.f32 %v981, %v1592
      %v1598 = vmul.f32 %v982, %v1592
      %v1599 = vmul.f32 %v983, %v1592
      %v1600 = vmul.f32 %v984, %v1592
      %v1601 = vmul.f32 %v985, %v1592
      %v1602 = vmul.f32 %v986, %v1592
      %v1603 = vmul.f32 %v987, %v1592
      %v1604 = vmul.f32 %v988, %v1592
      %v1605 = vmul.f32 %v989, %v1592
      %v1606 = vmul.f32 %v990, %v1592
      %v1607 = vmul.f32 %v991, %v1592
      %v1608 = vmul.f32 %v992, %v1592
      %v1609 = vadd.f32 %v1573, %v1593
      %v1610 = vadd.f32 %v1574, %v1594
      %v1611 = vadd.f32 %v1575, %v1595
      %v1612 = vadd.f32 %v1576, %v1596
      %v1613 = vadd.f32 %v1577, %v1597
      %v1614 = vadd.f32 %v1578, %v1598
      %v1615 = vadd.f32 %v1579, %v1599
      %v1616 = vadd.f32 %v1580, %v1600
      %v1617 = vadd.f32 %v1581, %v1601
      %v1618 = vadd.f32 %v1582, %v1602
      %v1619 = vadd.f32 %v1583, %v1603
      %v1620 = vadd.f32 %v1584, %v1604
      %v1621 = vadd.f32 %v1585, %v1605
      %v1622 = vadd.f32 %v1586, %v1606
      %v1623 = vadd.f32 %v1587, %v1607
      %v1624 = vadd.f32 %v1588, %v1608
      %v1625 = vlaneseq
      %v1626 = vshrl.u32 %v1625, 7
      %v1627 = vsub.s32 4, %v1626
      %v1628 = vrot.slane %v1479, %v1627
      %v1629 = vmul.f32 %v979, %v1628
      %v1630 = vmul.f32 %v980, %v1628
      %v1631 = vmul.f32 %v981, %v1628
      %v1632 = vmul.f32 %v982, %v1628
      %v1633 = vmul.f32 %v983, %v1628
      %v1634 = vmul.f32 %v984, %v1628
      %v1635 = vmul.f32 %v985, %v1628
      %v1636 = vmul.f32 %v986, %v1628
      %v1637 = vmul.f32 %v987, %v1628
      %v1638 = vmul.f32 %v988, %v1628
      %v1639 = vmul.f32 %v989, %v1628
      %v1640 = vmul.f32 %v990, %v1628
      %v1641 = vmul.f32 %v991, %v1628
      %v1642 = vmul.f32 %v992, %v1628
      %v1643 = vmul.f32 %v993, %v1628
      %v1644 = vmul.f32 %v994, %v1628
      %v1645 = vadd.f32 %v1609, %v1629
      %v1646 = vadd.f32 %v1610, %v1630
      %v1647 = vadd.f32 %v1611, %v1631
      %v1648 = vadd.f32 %v1612, %v1632
      %v1649 = vadd.f32 %v1613, %v1633
      %v1650 = vadd.f32 %v1614, %v1634
      %v1651 = vadd.f32 %v1615, %v1635
      %v1652 = vadd.f32 %v1616, %v1636
      %v1653 = vadd.f32 %v1617, %v1637
      %v1654 = vadd.f32 %v1618, %v1638
      %v1655 = vadd.f32 %v1619, %v1639
      %v1656 = vadd.f32 %v1620, %v1640
      %v1657 = vadd.f32 %v1621, %v1641
      %v1658 = vadd.f32 %v1622, %v1642
      %v1659 = vadd.f32 %v1623, %v1643
      %v1660 = vadd.f32 %v1624, %v1644
      %v1661 = vlaneseq
      %v1662 = vshrl.u32 %v1661, 7
      %v1663 = vsub.s32 7, %v1662
      %v1664 = vrot.slane %v1479, %v1663
      %v1665 = vmul.f32 %v981, %v1664
      %v1666 = vmul.f32 %v982, %v1664
      %v1667 = vmul.f32 %v983, %v1664
      %v1668 = vmul.f32 %v984, %v1664
      %v1669 = vmul.f32 %v985, %v1664
      %v1670 = vmul.f32 %v986, %v1664
      %v1671 = vmul.f32 %v987, %v1664
      %v1672 = vmul.f32 %v988, %v1664
      %v1673 = vmul.f32 %v989, %v1664
      %v1674 = vmul.f32 %v990, %v1664
      %v1675 = vmul.f32 %v991, %v1664
      %v1676 = vmul.f32 %v992, %v1664
      %v1677 = vmul.f32 %v993, %v1664
      %v1678 = vmul.f32 %v994, %v1664
      %v1679 = vmul.f32 %v995, %v1664
      %v1680 = vmul.f32 %v996, %v1664
      %v1681 = vadd.f32 %v1645, %v1665
      %v1682 = vadd.f32 %v1646, %v1666
      %v1683 = vadd.f32 %v1647, %v1667
      %v1684 = vadd.f32 %v1648, %v1668
      %v1685 = vadd.f32 %v1649, %v1669
      %v1686 = vadd.f32 %v1650, %v1670
      %v1687 = vadd.f32 %v1651, %v1671
      %v1688 = vadd.f32 %v1652, %v1672
      %v1689 = vadd.f32 %v1653, %v1673
      %v1690 = vadd.f32 %v1654, %v1674
      %v1691 = vadd.f32 %v1655, %v1675
      %v1692 = vadd.f32 %v1656, %v1676
      %v1693 = vadd.f32 %v1657, %v1677
      %v1694 = vadd.f32 %v1658, %v1678
      %v1695 = vadd.f32 %v1659, %v1679
      %v1696 = vadd.f32 %v1660, %v1680
      %v1697 = vlaneseq
      %v1698 = vshrl.u32 %v1697, 7
      %v1699 = vsub.s32 2, %v1698
      %v1700 = vrot.slane %v1479, %v1699
      %v1701 = vmul.f32 %v1459, %v1700
      %v1702 = vmul.f32 %v1460, %v1700
      %v1703 = vmul.f32 %v1461, %v1700
      %v1704 = vmul.f32 %v1462, %v1700
      %v1705 = vmul.f32 %v1463, %v1700
      %v1706 = vmul.f32 %v1464, %v1700
      %v1707 = vmul.f32 %v1465, %v1700
      %v1708 = vmul.f32 %v1466, %v1700
      %v1709 = vmul.f32 %v1467, %v1700
      %v1710 = vmul.f32 %v1468, %v1700
      %v1711 = vmul.f32 %v1469, %v1700
      %v1712 = vmul.f32 %v1470, %v1700
      %v1713 = vmul.f32 %v1471, %v1700
      %v1714 = vmul.f32 %v1472, %v1700
      %v1715 = vmul.f32 %v1473, %v1700
      %v1716 = vmul.f32 %v1474, %v1700
      %v1717 = vadd.f32 %v1681, %v1701
      %v1718 = vadd.f32 %v1682, %v1702
      %v1719 = vadd.f32 %v1683, %v1703
      %v1720 = vadd.f32 %v1684, %v1704
      %v1721 = vadd.f32 %v1685, %v1705
      %v1722 = vadd.f32 %v1686, %v1706
      %v1723 = vadd.f32 %v1687, %v1707
      %v1724 = vadd.f32 %v1688, %v1708
      %v1725 = vadd.f32 %v1689, %v1709
      %v1726 = vadd.f32 %v1690, %v1710
      %v1727 = vadd.f32 %v1691, %v1711
      %v1728 = vadd.f32 %v1692, %v1712
      %v1729 = vadd.f32 %v1693, %v1713
      %v1730 = vadd.f32 %v1694, %v1714
      %v1731 = vadd.f32 %v1695, %v1715
      %v1732 = vadd.f32 %v1696, %v1716
      %v1733 = vlaneseq
      %v1734 = vshrl.u32 %v1733, 7
      %v1735 = vsub.s32 5, %v1734
      %v1736 = vrot.slane %v1479, %v1735
      %v1737 = vmul.f32 %v1461, %v1736
      %v1738 = vmul.f32 %v1462, %v1736
      %v1739 = vmul.f32 %v1463, %v1736
      %v1740 = vmul.f32 %v1464, %v1736
      %v1741 = vmul.f32 %v1465, %v1736
      %v1742 = vmul.f32 %v1466, %v1736
      %v1743 = vmul.f32 %v1467, %v1736
      %v1744 = vmul.f32 %v1468, %v1736
      %v1745 = vmul.f32 %v1469, %v1736
      %v1746 = vmul.f32 %v1470, %v1736
      %v1747 = vmul.f32 %v1471, %v1736
      %v1748 = vmul.f32 %v1472, %v1736
      %v1749 = vmul.f32 %v1473, %v1736
      %v1750 = vmul.f32 %v1474, %v1736
      %v1751 = vmul.f32 %v1475, %v1736
      %v1752 = vmul.f32 %v1476, %v1736
      %v1753 = vadd.f32 %v1717, %v1737
      %v1754 = vadd.f32 %v1718, %v1738
      %v1755 = vadd.f32 %v1719, %v1739
      %v1756 = vadd.f32 %v1720, %v1740
      %v1757 = vadd.f32 %v1721, %v1741
      %v1758 = vadd.f32 %v1722, %v1742
      %v1759 = vadd.f32 %v1723, %v1743
      %v1760 = vadd.f32 %v1724, %v1744
      %v1761 = vadd.f32 %v1725, %v1745
      %v1762 = vadd.f32 %v1726, %v1746
      %v1763 = vadd.f32 %v1727, %v1747
      %v1764 = vadd.f32 %v1728, %v1748
      %v1765 = vadd.f32 %v1729, %v1749
      %v1766 = vadd.f32 %v1730, %v1750
      %v1767 = vadd.f32 %v1731, %v1751
      %v1768 = vadd.f32 %v1732, %v1752
      %v1769 = vlaneseq
      %v1770 = vshrl.u32 %v1769, 7
      %v1771 = vsub.s32 0, %v1770
      %v1772 = vrot.slane %v1480, %v1771
      %v1773 = vmul.f32 %v1463, %v1772
      %v1774 = vmul.f32 %v1464, %v1772
      %v1775 = vmul.f32 %v1465, %v1772
      %v1776 = vmul.f32 %v1466, %v1772
      %v1777 = vmul.f32 %v1467, %v1772
      %v1778 = vmul.f32 %v1468, %v1772
      %v1779 = vmul.f32 %v1469, %v1772
      %v1780 = vmul.f32 %v1470, %v1772
      %v1781 = vmul.f32 %v1471, %v1772
      %v1782 = vmul.f32 %v1472, %v1772
      %v1783 = vmul.f32 %v1473, %v1772
      %v1784 = vmul.f32 %v1474, %v1772
      %v1785 = vmul.f32 %v1475, %v1772
      %v1786 = vmul.f32 %v1476, %v1772
      %v1787 = vmul.f32 %v1477, %v1772
      %v1788 = vmul.f32 %v1478, %v1772
      %v1789 = vadd.f32 %v1753, %v1773
      %v1790 = vadd.f32 %v1754, %v1774
      %v1791 = vadd.f32 %v1755, %v1775
      %v1792 = vadd.f32 %v1756, %v1776
      %v1793 = vadd.f32 %v1757, %v1777
      %v1794 = vadd.f32 %v1758, %v1778
      %v1795 = vadd.f32 %v1759, %v1779
      %v1796 = vadd.f32 %v1760, %v1780
      %v1797 = vadd.f32 %v1761, %v1781
      %v1798 = vadd.f32 %v1762, %v1782
      %v1799 = vadd.f32 %v1763, %v1783
      %v1800 = vadd.f32 %v1764, %v1784
      %v1801 = vadd.f32 %v1765, %v1785
      %v1802 = vadd.f32 %v1766, %v1786
      %v1803 = vadd.f32 %v1767, %v1787
      %v1804 = vadd.f32 %v1768, %v1788
      %v1805 = vld [vmem:[%s7] sm:$0x1]
      %v1807 = vlaneseq
      %v1808 = vshrl.u32 %v1807, 7
      %v1809 = vsub.s32 0, %v1808
      %v1810 = vrot.slane %v1805, %v1809
      %v1812 = vadd.f32 %v1789, %v1810
      %v1813 = vadd.f32 %v1790, %v1810
      %v1814 = vadd.f32 %v1791, %v1810
      %v1815 = vadd.f32 %v1792, %v1810
      %v1816 = vadd.f32 %v1793, %v1810
      %v1817 = vadd.f32 %v1794, %v1810
      %v1818 = vadd.f32 %v1795, %v1810
      %v1819 = vadd.f32 %v1796, %v1810
      %v1820 = vadd.f32 %v1797, %v1810
      %v1821 = vadd.f32 %v1798, %v1810
      %v1822 = vadd.f32 %v1799, %v1810
      %v1823 = vadd.f32 %v1800, %v1810
      %v1824 = vadd.f32 %v1801, %v1810
      %v1825 = vadd.f32 %v1802, %v1810
      %v1826 = vadd.f32 %v1803, %v1810
      %v1827 = vadd.f32 %v1804, %v1810
      %v1828 = vmax.f32 %v1812, 0.0
      %v1829 = vmax.f32 %v1813, 0.0
      %v1830 = vmax.f32 %v1814, 0.0
      %v1831 = vmax.f32 %v1815, 0.0
      %v1832 = vmax.f32 %v1816, 0.0
      %v1833 = vmax.f32 %v1817, 0.0
      %v1834 = vmax.f32 %v1818, 0.0
      %v1835 = vmax.f32 %v1819, 0.0
      %v1836 = vmax.f32 %v1820, 0.0
      %v1837 = vmax.f32 %v1821, 0.0
      %v1838 = vmax.f32 %v1822, 0.0
      %v1839 = vmax.f32 %v1823, 0.0
      %v1840 = vmax.f32 %v1824, 0.0
      %v1841 = vmax.f32 %v1825, 0.0
      %v1842 = vmax.f32 %v1826, 0.0
      %v1843 = vmax.f32 %v1827, 0.0
      %v1844 = vmin.f32 %v1828, 6.0
      %v1845 = vmin.f32 %v1829, 6.0
      %v1846 = vmin.f32 %v1830, 6.0
      %v1847 = vmin.f32 %v1831, 6.0
      %v1848 = vmin.f32 %v1832, 6.0
      %v1849 = vmin.f32 %v1833, 6.0
      %v1850 = vmin.f32 %v1834, 6.0
      %v1851 = vmin.f32 %v1835, 6.0
      %v1852 = vmin.f32 %v1836, 6.0
      %v1853 = vmin.f32 %v1837, 6.0
      %v1854 = vmin.f32 %v1838, 6.0
      %v1855 = vmin.f32 %v1839, 6.0
      %v1856 = vmin.f32 %v1840, 6.0
      %v1857 = vmin.f32 %v1841, 6.0
      %v1858 = vmin.f32 %v1842, 6.0
      %v1859 = vmin.f32 %v1843, 6.0
      %v1860 = vpack.c.bf16 %v1845, %v1844
      %v1861 = vpack.c.bf16 %v1847, %v1846
      %v1862 = vpack.c.bf16 %v1849, %v1848
      %v1863 = vpack.c.bf16 %v1851, %v1850
      %v1864 = vpack.c.bf16 %v1853, %v1852
      %v1865 = vpack.c.bf16 %v1855, %v1854
      %v1866 = vpack.c.bf16 %v1857, %v1856
      %v1867 = vpack.c.bf16 %v1859, %v1858
      %v1868 = vld [vmem:[%s8] sm:$0xf]
      %v1869 = vld [vmem:[%s8 + $0x4] sm:$0xf]
      %v1870 = vld [vmem:[%s8 + $0x8] sm:$0xf]
      %v1871 = vld [vmem:[%s8 + $0xc] sm:$0xf]
      %v1872 = vld [vmem:[%s8 + $0x10] sm:$0xf]
      %v1873 = vld [vmem:[%s8 + $0x14] sm:$0xf]
      %v1880 = vunpack.c.l.b16 %v1868
      %v1881 = vunpack.c.l.b16 %v1869
      %v1882 = vunpack.c.l.b16 %v1870
      %v1883 = vunpack.c.l.b16 %v1871
      %v1884 = vunpack.c.l.b16 %v1872
      %v1885 = vunpack.c.l.b16 %v1873
      %v1886 = vpack.c.b16 %v1881, %v1880
      %v1887 = vpack.c.b16 %v1883, %v1882
      %v1888 = vpack.c.b16 %v1885, %v1884
      %vm1892 = vcmask 392192
      %v1894 = vsel %vm1892, %v1860, 0
      %v1897 = vsel %vm1892, %v1861, 0
      %v1900 = vsel %vm1892, %v1862, 0
      %v1903 = vsel %vm1892, %v1863, 0
      %v1906 = vsel %vm1892, %v1864, 0
      %v1909 = vsel %vm1892, %v1865, 0
      %v1912 = vsel %vm1892, %v1866, 0
      %v1915 = vsel %vm1892, %v1867, 0
      %1917 = vmatprep.subr.bf16.mxu0 0
      %1918 = vmatpush1.bf16.msra.mxu0 %v1886
      %1919 = vmatprep.subr.bf16.mxu0 0
      %1920 = vmatpush1.bf16.msra.mxu0 %v1887
      %1921 = vmatprep.subr.bf16.mxu0 0
      %1922 = vmatpush1.bf16.msra.mxu0 %v1888
      %1923 = vmatprep.subr.bf16.mxu0 0
      %1924 = vmatpush1.bf16.msra.mxu0 0
      %1925 = vmatprep.subr.bf16.mxu0 0
      %1926 = vmatpush1.bf16.msra.mxu0 0
      %1927 = vmatprep.subr.bf16.mxu0 0
      %1928 = vmatpush1.bf16.msra.mxu0 0
      %1929 = vmatprep.subr.bf16.mxu0 0
      %1930 = vmatpush1.bf16.msra.mxu0 0
      %1931 = vmatprep.subr.bf16.mxu0 0
      %1932 = vmatpush1.bf16.msra.mxu0 0
      %1933 = vmatprep.subr.bf16.mxu0 0
      %1934 = vmatpush1.bf16.msra.mxu0 0
      %1935 = vmatprep.subr.bf16.mxu0 0
      %1936 = vmatpush1.bf16.msra.mxu0 0
      %1937 = vmatprep.subr.bf16.mxu0 0
      %1938 = vmatpush1.bf16.msra.mxu0 0
      %1939 = vmatprep.subr.bf16.mxu0 0
      %1940 = vmatpush1.bf16.msra.mxu0 0
      %1941 = vmatprep.subr.bf16.mxu0 0
      %1942 = vmatpush1.bf16.msra.mxu0 0
      %1943 = vmatprep.subr.bf16.mxu0 0
      %1944 = vmatpush1.bf16.msra.mxu0 0
      %1945 = vmatprep.subr.bf16.mxu0 0
      %1946 = vmatpush1.bf16.msra.mxu0 0
      %1947 = vmatprep.subr.bf16.mxu0 0
      %1948 = vmatpush1.bf16.msra.mxu0 0
      %1949 = vmatprep.mubr.bf16.mxu0 0
      %1950 = vmatmul.mubr.bf16.gmra.mrb[0].mxu0 %v1894
      %v1951 = vpop.f32.mrb[0].mxu0
      %v1952 = vadd.f32 0.0, %v1951
      %v1953 = vpop.f32.mrb[0].mxu0
      %v1954 = vpop.f32.mrb[0].mxu0
      %v1955 = vadd.f32 0.0, %v1954
      %v1956 = vpop.f32.mrb[0].mxu0
      %1957 = vmatprep.mubr.bf16.mxu0 0
      %1958 = vmatmul.mubr.bf16.gmra.mrb[0].mxu0 %v1897
      %v1959 = vpop.f32.mrb[0].mxu0
      %v1960 = vadd.f32 0.0, %v1959
      %v1961 = vpop.f32.mrb[0].mxu0
      %v1962 = vpop.f32.mrb[0].mxu0
      %v1963 = vadd.f32 0.0, %v1962
      %v1964 = vpop.f32.mrb[0].mxu0
      %1965 = vmatprep.mubr.bf16.mxu0 0
      %1966 = vmatmul.mubr.bf16.gmra.mrb[0].mxu0 %v1900
      %v1967 = vpop.f32.mrb[0].mxu0
      %v1968 = vadd.f32 0.0, %v1967
      %v1969 = vpop.f32.mrb[0].mxu0
      %v1970 = vpop.f32.mrb[0].mxu0
      %v1971 = vadd.f32 0.0, %v1970
      %v1972 = vpop.f32.mrb[0].mxu0
      %1973 = vmatprep.mubr.bf16.mxu0 0
      %1974 = vmatmul.mubr.bf16.gmra.mrb[0].mxu0 %v1903
      %v1975 = vpop.f32.mrb[0].mxu0
      %v1976 = vadd.f32 0.0, %v1975
      %v1977 = vpop.f32.mrb[0].mxu0
      %v1978 = vpop.f32.mrb[0].mxu0
      %v1979 = vadd.f32 0.0, %v1978
      %v1980 = vpop.f32.mrb[0].mxu0
      %1981 = vmatprep.mubr.bf16.mxu0 0
      %1982 = vmatmul.mubr.bf16.gmra.mrb[0].mxu0 %v1906
      %v1983 = vpop.f32.mrb[0].mxu0
      %v1984 = vadd.f32 0.0, %v1983
      %v1985 = vpop.f32.mrb[0].mxu0
      %v1986 = vpop.f32.mrb[0].mxu0
      %v1987 = vadd.f32 0.0, %v1986
      %v1988 = vpop.f32.mrb[0].mxu0
      %1989 = vmatprep.mubr.bf16.mxu0 0
      %1990 = vmatmul.mubr.bf16.gmra.mrb[0].mxu0 %v1909
      %v1991 = vpop.f32.mrb[0].mxu0
      %v1992 = vadd.f32 0.0, %v1991
      %v1993 = vpop.f32.mrb[0].mxu0
      %v1994 = vpop.f32.mrb[0].mxu0
      %v1995 = vadd.f32 0.0, %v1994
      %v1996 = vpop.f32.mrb[0].mxu0
      %1997 = vmatprep.mubr.bf16.mxu0 0
      %1998 = vmatmul.mubr.bf16.gmra.mrb[0].mxu0 %v1912
      %v1999 = vpop.f32.mrb[0].mxu0
      %v2000 = vadd.f32 0.0, %v1999
      %v2001 = vpop.f32.mrb[0].mxu0
      %v2002 = vpop.f32.mrb[0].mxu0
      %v2003 = vadd.f32 0.0, %v2002
      %v2004 = vpop.f32.mrb[0].mxu0
      %2005 = vmatprep.mubr.bf16.mxu0 0
      %2006 = vmatmul.mubr.bf16.gmra.mrb[0].mxu0 %v1915
      %v2007 = vpop.f32.mrb[0].mxu0
      %v2008 = vadd.f32 0.0, %v2007
      %v2009 = vpop.f32.mrb[0].mxu0
      %v2010 = vpop.f32.mrb[0].mxu0
      %v2011 = vadd.f32 0.0, %v2010
      %v2012 = vpop.f32.mrb[0].mxu0
      %2013 = vdwg.mxu0
      %v2014 = vld [vmem:[%s9] sm:$0x1]
      %v2016 = vlaneseq
      %v2017 = vshrl.u32 %v2016, 7
      %v2018 = vsub.s32 0, %v2017
      %v2019 = vrot.slane %v2014, %v2018
      %v2021 = vmul.f32 %v1952, %v2019
      %v2022 = vmul.f32 %v1955, %v2019
      %v2023 = vmul.f32 %v1960, %v2019
      %v2024 = vmul.f32 %v1963, %v2019
      %v2025 = vmul.f32 %v1968, %v2019
      %v2026 = vmul.f32 %v1971, %v2019
      %v2027 = vmul.f32 %v1976, %v2019
      %v2028 = vmul.f32 %v1979, %v2019
      %v2029 = vmul.f32 %v1984, %v2019
      %v2030 = vmul.f32 %v1987, %v2019
      %v2031 = vmul.f32 %v1992, %v2019
      %v2032 = vmul.f32 %v1995, %v2019
      %v2033 = vmul.f32 %v2000, %v2019
      %v2034 = vmul.f32 %v2003, %v2019
      %v2035 = vmul.f32 %v2008, %v2019
      %v2036 = vmul.f32 %v2011, %v2019
      %v2037 = vld [vmem:[%s10] sm:$0x1]
      %v2039 = vlaneseq
      %v2040 = vshrl.u32 %v2039, 7
      %v2041 = vsub.s32 0, %v2040
      %v2042 = vrot.slane %v2037, %v2041
      %v2044 = vadd.f32 %v2021, %v2042
      %v2045 = vadd.f32 %v2022, %v2042
      %v2046 = vadd.f32 %v2023, %v2042
      %v2047 = vadd.f32 %v2024, %v2042
      %v2048 = vadd.f32 %v2025, %v2042
      %v2049 = vadd.f32 %v2026, %v2042
      %v2050 = vadd.f32 %v2027, %v2042
      %v2051 = vadd.f32 %v2028, %v2042
      %v2052 = vadd.f32 %v2029, %v2042
      %v2053 = vadd.f32 %v2030, %v2042
      %v2054 = vadd.f32 %v2031, %v2042
      %v2055 = vadd.f32 %v2032, %v2042
      %v2056 = vadd.f32 %v2033, %v2042
      %v2057 = vadd.f32 %v2034, %v2042
      %v2058 = vadd.f32 %v2035, %v2042
      %v2059 = vadd.f32 %v2036, %v2042
      %v2060 = vunpack.c.l.bf16 %v495
      %v2061 = vunpack.c.l.bf16 %v496
      %v2062 = vunpack.c.l.bf16 %v497
      %v2063 = vunpack.c.l.bf16 %v498
      %v2064 = vunpack.c.l.bf16 %v499
      %v2065 = vunpack.c.l.bf16 %v500
      %v2066 = vunpack.c.l.bf16 %v501
      %v2067 = vunpack.c.l.bf16 %v502
      %v2068 = vunpack.c.l.bf16 %v503
      %v2069 = vunpack.c.l.bf16 %v504
      %v2070 = vunpack.c.l.bf16 %v505
      %v2071 = vunpack.c.l.bf16 %v506
      %v2072 = vunpack.c.l.bf16 %v507
      %v2073 = vunpack.c.l.bf16 %v508
      %v2074 = vunpack.c.l.bf16 %v509
      %v2075 = vunpack.c.l.bf16 %v510
      %v2076 = vadd.f32 %v2044, %v2060
      %v2077 = vadd.f32 %v2045, %v2061
      %v2078 = vadd.f32 %v2046, %v2062
      %v2079 = vadd.f32 %v2047, %v2063
      %v2080 = vadd.f32 %v2048, %v2064
      %v2081 = vadd.f32 %v2049, %v2065
      %v2082 = vadd.f32 %v2050, %v2066
      %v2083 = vadd.f32 %v2051, %v2067
      %v2084 = vadd.f32 %v2052, %v2068
      %v2085 = vadd.f32 %v2053, %v2069
      %v2086 = vadd.f32 %v2054, %v2070
      %v2087 = vadd.f32 %v2055, %v2071
      %v2088 = vadd.f32 %v2056, %v2072
      %v2089 = vadd.f32 %v2057, %v2073
      %v2090 = vadd.f32 %v2058, %v2074
      %v2091 = vadd.f32 %v2059, %v2075
      %2092 = vst.msk [vmem:[%s492] sm:$0xff] %vm566, %v2076
      %2093 = vst.msk [vmem:[%s492 + $0x8] sm:$0xff] %vm566, %v2077
      %2094 = vst.msk [vmem:[%s492 + $0x10] sm:$0xff] %vm566, %v2078
      %2095 = vst.msk [vmem:[%s492 + $0x18] sm:$0xff] %vm566, %v2079
      %2096 = vst.msk [vmem:[%s492 + $0x20] sm:$0xff] %vm566, %v2080
      %2097 = vst.msk [vmem:[%s492 + $0x28] sm:$0xff] %vm566, %v2081
      %2098 = vst.msk [vmem:[%s492 + $0x30] sm:$0xff] %vm566, %v2082
      %2099 = vst.msk [vmem:[%s492 + $0x38] sm:$0xff] %vm566, %v2083
      %2100 = vst.msk [vmem:[%s492 + $0x40] sm:$0xff] %vm566, %v2084
      %2101 = vst.msk [vmem:[%s492 + $0x48] sm:$0xff] %vm566, %v2085
      %2102 = vst.msk [vmem:[%s492 + $0x50] sm:$0xff] %vm566, %v2086
      %2103 = vst.msk [vmem:[%s492 + $0x58] sm:$0xff] %vm566, %v2087
      %2104 = vst.msk [vmem:[%s492 + $0x60] sm:$0xff] %vm566, %v2088
      %2105 = vst.msk [vmem:[%s492 + $0x68] sm:$0xff] %vm566, %v2089
      %2106 = vst.msk [vmem:[%s492 + $0x70] sm:$0xff] %vm566, %v2090
      %2107 = vst.msk [vmem:[%s492 + $0x78] sm:$0xff] %vm566, %v2091
      %s2108 = smul.u32 16, %s27
      %p2109 = scmp.lt.s32.totalorder %s26, 1
      %s2110 = scalar_select %p2109, %s26, 1
      %p2111 = scmp.lt.s32.totalorder %s2108, 31
      %s2112 = scalar_select %p2111, %s2108, 31
      %s2113 = smul.addr %s2110, 32
      %s2114 = sadd.s32 %s2112, %s2113
      %s2115 = smul.addr %s2114, 8
      %s2116 = scalar_lea.vmem %s11, %s2115
      // Predicated region
      $region65: #{tpu_custom_call.1} parent=63 // pred_check
        %p2117 = pneg %p306
      $region66: #{tpu_custom_call.1} parent=63 // pred_check_branch
        %2119 = sbr.rel (%p2117) target = $region68
      $region67: #{tpu_custom_call.1} parent=63 // pred_region
        %s2120 = smul.u32 16, %s27
      $region68: #{tpu_custom_call.1} parent=63 // pred_fallthru
        _
    $region64: #{tpu_custom_call.1} parent=5 // pred_fallthru
      _
    %p2121 = scmp.le.s32.totalorder 2, %s17
    // Predicated region
    $region69: #{tpu_custom_call.1} parent=5 // pred_check
      %p2122 = pneg %p2121
    $region70: #{tpu_custom_call.1} parent=5 // pred_check_branch
      %2124 = sbr.rel (%p2122) target = $region72
    $region71: #{tpu_custom_call.1} parent=5 // pred_region
      %s2125 = ssub.s32 %s17, 2
      // Predicated region
      $region73: #{tpu_custom_call.1} parent=71 // pred_check
        %p2126 = pneg %p312
      $region74: #{tpu_custom_call.1} parent=71 // pred_check_branch
        %2128 = sbr.rel (%p2126) target = $region76
      $region75: #{tpu_custom_call.1} parent=71 // pred_region
        %s2129 = smul.u32 16, %s29
        %p2130 = scmp.lt.s32.totalorder %s28, 1
        %s2131 = scalar_select %p2130, %s28, 1
        %p2132 = scmp.lt.s32.totalorder %s2129, 31
        %s2133 = scalar_select %p2132, %s2129, 31
        %s2134 = smul.addr %s2131, 32
        %s2135 = sadd.s32 %s2133, %s2134
        %s2136 = smul.addr %s2135, 8
        %s2137 = scalar_lea.vmem %s11, %s2136
      $region76: #{tpu_custom_call.1} parent=71 // pred_fallthru
        _
    $region72: #{tpu_custom_call.1} parent=5 // pred_fallthru
      _
  $region6: #{tpu_custom_call.1} parent=0 // loop_footer
    %s21 = sadd.s32 1, %s17
  $region7: #{tpu_custom_call.1} parent=0 // loop_footer_branch
    %16 = sbr.rel target = $region3
  $region8: #{tpu_custom_call.1} parent=0 // loop_exit
    _

</llo_original>
